<compile_context>
chip_gen: v7x
topology: tpu7x:2x2x1
jax: 0.10.0
libtpu: 0.0.40
codegen_flags: <defaults>
</compile_context>

<pallas_src>
import functools

import jax
import jax.numpy as jnp
from jax import lax
from jax.experimental import pallas as pl
from jax.experimental.pallas import tpu as pltpu

BN_EPS = 1e-5


def _bn_relu_rows(t, inv_n):
    """Training-mode BatchNorm (gamma=1, beta=0) per row, one-pass stats, then ReLU."""
    s1 = jnp.sum(t, axis=1, keepdims=True)
    s2 = jnp.sum(t * t, axis=1, keepdims=True)
    m = s1 * inv_n
    v = s2 * inv_n - m * m
    return jnp.maximum((t - m) * lax.rsqrt(v + BN_EPS), 0.0)


def bam_kernel(x_ref, mask_ref, wl1_ref, wl2_ref, bl2_ref,
               wc1_ref, wc2_ref, wc3_ref, wc4_ref,
               o_ref, col_ref, *, n_img, n_ch, hw, img_w, dil, crp):
    f32 = jnp.float32
    p = n_img * hw
    inv_p = 1.0 / p
    inv_n = 1.0 / n_img

    # ---- In-kernel layout shuffle: NCHW rows (N*C, HW) -> channel-major (C, N*HW).
    #      Two aligned (C, HW) sublane/lane-block copies; replaces two XLA transposes
    #      (each a full HBM read+write) around the kernel.
    x_imgs = [x_ref[pl.ds(i * n_ch, n_ch), :] for i in range(n_img)]          # (C, HW)
    x = jnp.concatenate(x_imgs, axis=1)                                       # (C, P)

    # ---------------- Channel attention branch ----------------
    # Per-image global average pool: one lane reduction per image (XLU slot),
    # no padded (P, N) pooling matrix, no extra DMA.
    pooled = jnp.concatenate(
        [jnp.sum(xi, axis=1, keepdims=True) for xi in x_imgs], axis=1) * (1.0 / hw)  # (C, N)
    h1 = jnp.dot(wl1_ref[...], pooled, preferred_element_type=f32)            # (crp, N)
    h1 = _bn_relu_rows(h1, inv_n)                                             # BN1d over batch + ReLU
    ch = jnp.dot(wl2_ref[...], h1, preferred_element_type=f32) + bl2_ref[...]  # (C, N)

    # ---------------- Spatial attention branch ----------------
    # 1x1 conv (C -> C/r, zero-padded to crp rows) + BN + ReLU.
    s = _bn_relu_rows(jnp.dot(wc1_ref[...], x, preferred_element_type=f32), inv_p)  # (crp, P)

    # Dilated 3x3 'same' conv taps: pixels are flattened n*H*W + y*W + x, so a spatial
    # shift is a lane rotation; out-of-image (and cross-image-wrapped) taps are zeroed
    # by the precomputed 0/1 masks, shared by both dilated convs.
    masks = mask_ref[...]                                                     # (9, P)
    offs = [ky * dil * img_w + kx * dil for ky in (-1, 0, 1) for kx in (-1, 0, 1)]

    def dilated_conv(t, w_ref):
        # im2col into the (9*crp, P) VMEM scratch: 9 XLU lane-rolls + mask multiplies
        # written at 8-aligned sublane offsets (no concat relayout), then ONE matmul.
        for i, off in enumerate(offs):
            if off == 0:
                col_ref[pl.ds(i * crp, crp), :] = t                 # center tap: mask all-ones
            else:
                rolled = pltpu.roll(t, (-off) % p, axis=1)
                col_ref[pl.ds(i * crp, crp), :] = rolled * masks[i:i + 1, :]
        return jnp.dot(w_ref[...], col_ref[...], preferred_element_type=f32)  # (crp, P)

    s = _bn_relu_rows(dilated_conv(s, wc2_ref), inv_p)                        # (crp, P)
    s = _bn_relu_rows(dilated_conv(s, wc3_ref), inv_p)                        # (crp, P)

    # Final 1x1 conv (C/r -> 1) on the VPU/XLU: broadcast-multiply + sublane reduce
    # (an M=1, K=crp MXU pass would be an almost entirely idle push/pop on the tail).
    sp = jnp.sum(wc4_ref[...] * s, axis=0, keepdims=True)                     # (1, P)
    sp = _bn_relu_rows(sp, inv_p)                                             # (1, P)

    # ---- Combine: out = x * (1 + sigmoid(ch + sp)) = x * (1.5 + 0.5*tanh(0.5*(ch+sp)))
    # Per-image channel broadcast on the VPU (no K=2 MXU hop), tanh on the EUP,
    # stores go straight back in NCHW layout (lane-dense, HW multiple of 128).
    for i in range(n_img):
        logit = ch[:, i:i + 1] + sp[:, i * hw:(i + 1) * hw]                   # (C, HW)
        o_ref[pl.ds(i * n_ch, n_ch), :] = x_imgs[i] * (1.5 + 0.5 * jnp.tanh(0.5 * logit))


def bam_forward(x, params, *, ratio=16, dilation=4):
    n, c, h, w = x.shape
    cr = c // ratio
    crp = ((cr + 7) // 8) * 8          # pad C/ratio up to a full sublane granule
    hw = h * w
    p = n * hw
    f32 = jnp.float32

    # NCHW -> (N*C, HW) is a contiguity-preserving reshape: no XLA transpose, no extra
    # HBM round trip.  The channel-major shuffle happens inside the kernel.
    x2d = x.reshape(n * c, hw).astype(f32)

    # Per-tap validity masks for the dilated 3x3 'same' convs (built once, shared).
    yy = (jnp.arange(p, dtype=jnp.int32) % hw) // w
    xx = jnp.arange(p, dtype=jnp.int32) % w
    masks = []
    for ky in (-1, 0, 1):
        for kx in (-1, 0, 1):
            valid = ((yy + ky * dilation >= 0) & (yy + ky * dilation < h) &
                     (xx + kx * dilation >= 0) & (xx + kx * dilation < w))
            masks.append(valid)
    tap_masks = jnp.stack(masks).astype(f32)                                  # (9, P)

    # Weights, pre-reshaped / zero-padded for the kernel layout.  Padded rows/columns
    # are exactly zero so the extra BN rows stay inert end-to-end.  Biases of layers
    # followed directly by training-mode BN are cancelled and not passed.
    def pad_rows(m, rows):
        return jnp.pad(m.astype(f32), ((0, rows - m.shape[0]), (0, 0)))

    wl1 = pad_rows(params["lin1_w"], crp)                                     # (crp, C)
    wl2 = jnp.pad(params["lin2_w"].astype(f32), ((0, 0), (0, crp - cr)))      # (C, crp)
    bl2 = params["lin2_b"].reshape(c, 1).astype(f32)                          # (C, 1)
    wc1 = pad_rows(params["conv1_w"].reshape(cr, c), crp)                     # (crp, C)

    def pad_conv33(wt):      # (cr, cr, 3, 3) -> (crp, 9*crp), tap-major columns
        wf = wt.astype(f32).transpose(0, 2, 3, 1).reshape(cr, 9, cr)
        wf = jnp.pad(wf, ((0, crp - cr), (0, 0), (0, crp - cr)))
        return wf.reshape(crp, 9 * crp)

    wc2 = pad_conv33(params["conv2_w"])                                       # (crp, 9*crp)
    wc3 = pad_conv33(params["conv3_w"])                                       # (crp, 9*crp)
    wc4 = jnp.pad(params["conv4_w"].reshape(1, cr).astype(f32),
                  ((0, 0), (0, crp - cr))).T                                  # (crp, 1)

    vmem = pl.BlockSpec(memory_space=pltpu.MemorySpace.VMEM)
    kernel = functools.partial(bam_kernel, n_img=n, n_ch=c, hw=hw,
                               img_w=w, dil=dilation, crp=crp)

    out2d = pl.pallas_call(
        kernel,
        out_shape=jax.ShapeDtypeStruct((n * c, hw), f32),
        in_specs=[vmem] * 9,
        out_specs=vmem,
        scratch_shapes=[pltpu.VMEM((9 * crp, p), f32)],                       # im2col buffer
    )(x2d, tap_masks, wl1, wl2, bl2, wc1, wc2, wc3, wc4)

    return out2d.reshape(n, c, h, w)


def bam_reference(x, params, *, ratio=16, dilation=4):
    """Pure-JAX reference mirroring the PyTorch BAM forward (training-mode BN)."""
    del ratio  # implied by parameter shapes

    def bn(t, axes):
        m = t.mean(axis=axes, keepdims=True)
        v = t.var(axis=axes, keepdims=True)
        return (t - m) / jnp.sqrt(v + BN_EPS)

    # Channel branch: V f n a f
    g = x.mean(axis=(2, 3))                                                   # (N, C)
    h1 = g @ params["lin1_w"].T + params["lin1_b"]                            # (N, Cr)
    h1 = jnp.maximum(bn(h1, (0,)), 0.0)
    ch = h1 @ params["lin2_w"].T + params["lin2_b"]                           # (N, C)

    # Spatial branch: (c n a) x 4
    def conv(t, wt, b, dil):
        pad = dil * (wt.shape[-1] // 2)
        y = lax.conv_general_dilated(
            t, wt, window_strides=(1, 1), padding=[(pad, pad), (pad, pad)],
            rhs_dilation=(dil, dil), dimension_numbers=("NCHW", "OIHW", "NCHW"))
        return y + b[None, :, None, None]

    s = x
    for name, dl in (("conv1", 1), ("conv2", dilation),
                     ("conv3", dilation), ("conv4", 1)):
        s = conv(s, params[name + "_w"], params[name + "_b"], dl)
        s = jnp.maximum(bn(s, (0, 2, 3)), 0.0)                                # (N, ., H, W)

    att = jax.nn.sigmoid(ch[:, :, None, None] + s)                            # (N, C, H, W)
    return x * (1.0 + att)


if __name__ == "__main__":
    key = jax.random.PRNGKey(0)
    n, c, h, w = 2, 64, 16, 16
    ratio, dilation = 16, 4
    cr = c // ratio

    ks = jax.random.split(key, 13)
    x = jax.random.normal(ks[0], (n, c, h, w), jnp.float32)
    params = dict(
        lin1_w=jax.random.normal(ks[1], (cr, c), jnp.float32) * 0.2,
        lin1_b=jax.random.normal(ks[2], (cr,), jnp.float32) * 0.1,
        lin2_w=jax.random.normal(ks[3], (c, cr), jnp.float32) * 0.2,
        lin2_b=jax.random.normal(ks[4], (c,), jnp.float32) * 0.1,
        conv1_w=jax.random.normal(ks[5], (cr, c, 1, 1), jnp.float32) * 0.2,
        conv1_b=jax.random.normal(ks[6], (cr,), jnp.float32) * 0.1,
        conv2_w=jax.random.normal(ks[7], (cr, cr, 3, 3), jnp.float32) * 0.2,
        conv2_b=jax.random.normal(ks[8], (cr,), jnp.float32) * 0.1,
        conv3_w=jax.random.normal(ks[9], (cr, cr, 3, 3), jnp.float32) * 0.2,
        conv3_b=jax.random.normal(ks[10], (cr,), jnp.float32) * 0.1,
        conv4_w=jax.random.normal(ks[11], (1, cr, 1, 1), jnp.float32) * 0.2,
        conv4_b=jax.random.normal(ks[12], (1,), jnp.float32) * 0.1,
    )

    out = jax.block_until_ready(bam_forward(x, params, ratio=ratio, dilation=dilation))
    ref = bam_reference(x, params, ratio=ratio, dilation=dilation)
    err = float(jnp.max(jnp.abs(out - ref)))
    assert jnp.allclose(out, ref, rtol=2e-3, atol=2e-3), f"max abs err {err}"
    print("KERNEL_OK")
</pallas_src>

<mosaic_0001>
module attributes {stable_mosaic.version = 11 : i64} {
  func.func @bam_kernel(%arg0: memref<128x256xf32, #tpu.memory_space<vmem>>, %arg1: memref<9x512xf32, #tpu.memory_space<vmem>>, %arg2: memref<8x64xf32, #tpu.memory_space<vmem>>, %arg3: memref<64x8xf32, #tpu.memory_space<vmem>>, %arg4: memref<64x1xf32, #tpu.memory_space<vmem>>, %arg5: memref<8x64xf32, #tpu.memory_space<vmem>>, %arg6: memref<8x72xf32, #tpu.memory_space<vmem>>, %arg7: memref<8x72xf32, #tpu.memory_space<vmem>>, %arg8: memref<8x1xf32, #tpu.memory_space<vmem>>, %arg9: memref<128x256xf32, #tpu.memory_space<vmem>>, %arg10: memref<72x512xf32, #tpu.memory_space<vmem>>) attributes {dimension_semantics = [], scalar_prefetch = 0 : i64, scratch_operands = 1 : i64, tpu.core_type = #tpu.core_type<tc>} {
    %c0 = arith.constant 0 : index
    %c0_0 = arith.constant 0 : index
    %0 = vector.load %arg0[%c0, %c0_0] : memref<128x256xf32, #tpu.memory_space<vmem>>, vector<64x256xf32>
    %c64 = arith.constant 64 : index
    %c0_1 = arith.constant 0 : index
    %1 = vector.load %arg0[%c64, %c0_1] : memref<128x256xf32, #tpu.memory_space<vmem>>, vector<64x256xf32>
    %2 = tpu.concatenate %0, %1 in 1 : vector<64x256xf32>, vector<64x256xf32> -> vector<64x512xf32>
    %cst = arith.constant dense<0.000000e+00> : vector<64xf32>
    %3 = vector.multi_reduction <add>, %0, %cst [1] : vector<64x256xf32> to vector<64xf32>
    %4 = vector.shape_cast %3 : vector<64xf32> to vector<64x1xf32>
    %cst_2 = arith.constant dense<0.000000e+00> : vector<64xf32>
    %5 = vector.multi_reduction <add>, %1, %cst_2 [1] : vector<64x256xf32> to vector<64xf32>
    %6 = vector.shape_cast %5 : vector<64xf32> to vector<64x1xf32>
    %7 = tpu.concatenate %4, %6 in 1 : vector<64x1xf32>, vector<64x1xf32> -> vector<64x2xf32>
    %cst_3 = arith.constant 3.906250e-03 : f32
    %8 = vector.broadcast %cst_3 : f32 to vector<64x2xf32>
    %9 = arith.mulf %7, %8 : vector<64x2xf32>
    %c0_4 = arith.constant 0 : index
    %c0_5 = arith.constant 0 : index
    %10 = vector.load %arg2[%c0_4, %c0_5] : memref<8x64xf32, #tpu.memory_space<vmem>>, vector<8x64xf32>
    %cst_6 = arith.constant dense<0.000000e+00> : vector<8x2xf32>
    %11 = tpu.matmul %10, %9, %cst_6 {dimension_numbers = #tpu.dot_dimension_numbers<[1], [0], [0], [1], [0, 0, 1, 1], [], []>} : vector<8x64xf32>, vector<64x2xf32>, vector<8x2xf32> -> vector<8x2xf32>
    %cst_7 = arith.constant dense<0.000000e+00> : vector<8xf32>
    %12 = vector.multi_reduction <add>, %11, %cst_7 [1] : vector<8x2xf32> to vector<8xf32>
    %13 = vector.shape_cast %12 : vector<8xf32> to vector<8x1xf32>
    %14 = arith.mulf %11, %11 : vector<8x2xf32>
    %cst_8 = arith.constant dense<0.000000e+00> : vector<8xf32>
    %15 = vector.multi_reduction <add>, %14, %cst_8 [1] : vector<8x2xf32> to vector<8xf32>
    %16 = vector.shape_cast %15 : vector<8xf32> to vector<8x1xf32>
    %cst_9 = arith.constant 5.000000e-01 : f32
    %17 = vector.broadcast %cst_9 : f32 to vector<8x1xf32>
    %18 = arith.mulf %13, %17 : vector<8x1xf32>
    %cst_10 = arith.constant 5.000000e-01 : f32
    %19 = vector.broadcast %cst_10 : f32 to vector<8x1xf32>
    %20 = arith.mulf %16, %19 : vector<8x1xf32>
    %21 = arith.mulf %18, %18 : vector<8x1xf32>
    %22 = arith.subf %20, %21 : vector<8x1xf32>
    %23 = vector.broadcast %18 : vector<8x1xf32> to vector<8x2xf32>
    %24 = arith.subf %11, %23 : vector<8x2xf32>
    %cst_11 = arith.constant 9.99999974E-6 : f32
    %25 = vector.broadcast %cst_11 : f32 to vector<8x1xf32>
    %26 = arith.addf %22, %25 : vector<8x1xf32>
    %27 = math.rsqrt %26 : vector<8x1xf32>
    %28 = vector.broadcast %27 : vector<8x1xf32> to vector<8x2xf32>
    %29 = arith.mulf %24, %28 : vector<8x2xf32>
    %cst_12 = arith.constant 0.000000e+00 : f32
    %30 = vector.broadcast %cst_12 : f32 to vector<8x2xf32>
    %31 = arith.maximumf %29, %30 : vector<8x2xf32>
    %c0_13 = arith.constant 0 : index
    %c0_14 = arith.constant 0 : index
    %32 = vector.load %arg3[%c0_13, %c0_14] : memref<64x8xf32, #tpu.memory_space<vmem>>, vector<64x8xf32>
    %cst_15 = arith.constant dense<0.000000e+00> : vector<64x2xf32>
    %33 = tpu.matmul %32, %31, %cst_15 {dimension_numbers = #tpu.dot_dimension_numbers<[1], [0], [0], [1], [0, 0, 1, 1], [], []>} : vector<64x8xf32>, vector<8x2xf32>, vector<64x2xf32> -> vector<64x2xf32>
    %c0_16 = arith.constant 0 : index
    %c0_17 = arith.constant 0 : index
    %34 = vector.load %arg4[%c0_16, %c0_17] : memref<64x1xf32, #tpu.memory_space<vmem>>, vector<64x1xf32>
    %35 = vector.broadcast %34 : vector<64x1xf32> to vector<64x2xf32>
    %36 = arith.addf %33, %35 : vector<64x2xf32>
    %c0_18 = arith.constant 0 : index
    %c0_19 = arith.constant 0 : index
    %37 = vector.load %arg5[%c0_18, %c0_19] : memref<8x64xf32, #tpu.memory_space<vmem>>, vector<8x64xf32>
    %cst_20 = arith.constant dense<0.000000e+00> : vector<8x512xf32>
    %38 = tpu.matmul %37, %2, %cst_20 {dimension_numbers = #tpu.dot_dimension_numbers<[1], [0], [0], [1], [0, 0, 1, 1], [], []>} : vector<8x64xf32>, vector<64x512xf32>, vector<8x512xf32> -> vector<8x512xf32>
    %cst_21 = arith.constant dense<0.000000e+00> : vector<8xf32>
    %39 = vector.multi_reduction <add>, %38, %cst_21 [1] : vector<8x512xf32> to vector<8xf32>
    %40 = vector.shape_cast %39 : vector<8xf32> to vector<8x1xf32>
    %41 = arith.mulf %38, %38 : vector<8x512xf32>
    %cst_22 = arith.constant dense<0.000000e+00> : vector<8xf32>
    %42 = vector.multi_reduction <add>, %41, %cst_22 [1] : vector<8x512xf32> to vector<8xf32>
    %43 = vector.shape_cast %42 : vector<8xf32> to vector<8x1xf32>
    %cst_23 = arith.constant 0.001953125 : f32
    %44 = vector.broadcast %cst_23 : f32 to vector<8x1xf32>
    %45 = arith.mulf %40, %44 : vector<8x1xf32>
    %cst_24 = arith.constant 0.001953125 : f32
    %46 = vector.broadcast %cst_24 : f32 to vector<8x1xf32>
    %47 = arith.mulf %43, %46 : vector<8x1xf32>
    %48 = arith.mulf %45, %45 : vector<8x1xf32>
    %49 = arith.subf %47, %48 : vector<8x1xf32>
    %50 = vector.broadcast %45 : vector<8x1xf32> to vector<8x512xf32>
    %51 = arith.subf %38, %50 : vector<8x512xf32>
    %cst_25 = arith.constant 9.99999974E-6 : f32
    %52 = vector.broadcast %cst_25 : f32 to vector<8x1xf32>
    %53 = arith.addf %49, %52 : vector<8x1xf32>
    %54 = math.rsqrt %53 : vector<8x1xf32>
    %55 = vector.broadcast %54 : vector<8x1xf32> to vector<8x512xf32>
    %56 = arith.mulf %51, %55 : vector<8x512xf32>
    %cst_26 = arith.constant 0.000000e+00 : f32
    %57 = vector.broadcast %cst_26 : f32 to vector<8x512xf32>
    %58 = arith.maximumf %56, %57 : vector<8x512xf32>
    %c0_27 = arith.constant 0 : index
    %c0_28 = arith.constant 0 : index
    %59 = vector.load %arg1[%c0_27, %c0_28] : memref<9x512xf32, #tpu.memory_space<vmem>>, vector<9x512xf32>
    %c68_i32 = arith.constant 68 : i32
    %60 = tpu.dynamic_rotate %58 by %c68_i32 dim 1 : vector<8x512xf32>, i32 -> vector<8x512xf32>
    %61 = vector.extract_strided_slice %59 {offsets = [0, 0], sizes = [1, 512], strides = [1, 1]} : vector<9x512xf32> to vector<1x512xf32>
    %62 = vector.broadcast %61 : vector<1x512xf32> to vector<8x512xf32>
    %63 = arith.mulf %60, %62 : vector<8x512xf32>
    %c0_29 = arith.constant 0 : index
    %c0_30 = arith.constant 0 : index
    %64 = vector.load %arg10[%c0_29, %c0_30] : memref<72x512xf32, #tpu.memory_space<vmem>>, vector<8x512xf32>
    tpu.vector_store %arg10[%c0_29, %c0_30], %63 {strides = array<i32>} : memref<72x512xf32, #tpu.memory_space<vmem>>, vector<8x512xf32>,
    %c64_i32 = arith.constant 64 : i32
    %65 = tpu.dynamic_rotate %58 by %c64_i32 dim 1 : vector<8x512xf32>, i32 -> vector<8x512xf32>
    %66 = vector.extract_strided_slice %59 {offsets = [1, 0], sizes = [1, 512], strides = [1, 1]} : vector<9x512xf32> to vector<1x512xf32>
    %67 = vector.broadcast %66 : vector<1x512xf32> to vector<8x512xf32>
    %68 = arith.mulf %65, %67 : vector<8x512xf32>
    %c8 = arith.constant 8 : index
    %c0_31 = arith.constant 0 : index
    %69 = vector.load %arg10[%c8, %c0_31] : memref<72x512xf32, #tpu.memory_space<vmem>>, vector<8x512xf32>
    tpu.vector_store %arg10[%c8, %c0_31], %68 {strides = array<i32>} : memref<72x512xf32, #tpu.memory_space<vmem>>, vector<8x512xf32>,
    %c60_i32 = arith.constant 60 : i32
    %70 = tpu.dynamic_rotate %58 by %c60_i32 dim 1 : vector<8x512xf32>, i32 -> vector<8x512xf32>
    %71 = vector.extract_strided_slice %59 {offsets = [2, 0], sizes = [1, 512], strides = [1, 1]} : vector<9x512xf32> to vector<1x512xf32>
    %72 = vector.broadcast %71 : vector<1x512xf32> to vector<8x512xf32>
    %73 = arith.mulf %70, %72 : vector<8x512xf32>
    %c16 = arith.constant 16 : index
    %c0_32 = arith.constant 0 : index
    %74 = vector.load %arg10[%c16, %c0_32] : memref<72x512xf32, #tpu.memory_space<vmem>>, vector<8x512xf32>
    tpu.vector_store %arg10[%c16, %c0_32], %73 {strides = array<i32>} : memref<72x512xf32, #tpu.memory_space<vmem>>, vector<8x512xf32>,
    %c4_i32 = arith.constant 4 : i32
    %75 = tpu.dynamic_rotate %58 by %c4_i32 dim 1 : vector<8x512xf32>, i32 -> vector<8x512xf32>
    %76 = vector.extract_strided_slice %59 {offsets = [3, 0], sizes = [1, 512], strides = [1, 1]} : vector<9x512xf32> to vector<1x512xf32>
    %77 = vector.broadcast %76 : vector<1x512xf32> to vector<8x512xf32>
    %78 = arith.mulf %75, %77 : vector<8x512xf32>
    %c24 = arith.constant 24 : index
    %c0_33 = arith.constant 0 : index
    %79 = vector.load %arg10[%c24, %c0_33] : memref<72x512xf32, #tpu.memory_space<vmem>>, vector<8x512xf32>
    tpu.vector_store %arg10[%c24, %c0_33], %78 {strides = array<i32>} : memref<72x512xf32, #tpu.memory_space<vmem>>, vector<8x512xf32>,
    %c32 = arith.constant 32 : index
    %c0_34 = arith.constant 0 : index
    %80 = vector.load %arg10[%c32, %c0_34] : memref<72x512xf32, #tpu.memory_space<vmem>>, vector<8x512xf32>
    tpu.vector_store %arg10[%c32, %c0_34], %58 {strides = array<i32>} : memref<72x512xf32, #tpu.memory_space<vmem>>, vector<8x512xf32>,
    %c508_i32 = arith.constant 508 : i32
    %81 = tpu.dynamic_rotate %58 by %c508_i32 dim 1 : vector<8x512xf32>, i32 -> vector<8x512xf32>
    %82 = vector.extract_strided_slice %59 {offsets = [5, 0], sizes = [1, 512], strides = [1, 1]} : vector<9x512xf32> to vector<1x512xf32>
    %83 = vector.broadcast %82 : vector<1x512xf32> to vector<8x512xf32>
    %84 = arith.mulf %81, %83 : vector<8x512xf32>
    %c40 = arith.constant 40 : index
    %c0_35 = arith.constant 0 : index
    %85 = vector.load %arg10[%c40, %c0_35] : memref<72x512xf32, #tpu.memory_space<vmem>>, vector<8x512xf32>
    tpu.vector_store %arg10[%c40, %c0_35], %84 {strides = array<i32>} : memref<72x512xf32, #tpu.memory_space<vmem>>, vector<8x512xf32>,
    %c452_i32 = arith.constant 452 : i32
    %86 = tpu.dynamic_rotate %58 by %c452_i32 dim 1 : vector<8x512xf32>, i32 -> vector<8x512xf32>
    %87 = vector.extract_strided_slice %59 {offsets = [6, 0], sizes = [1, 512], strides = [1, 1]} : vector<9x512xf32> to vector<1x512xf32>
    %88 = vector.broadcast %87 : vector<1x512xf32> to vector<8x512xf32>
    %89 = arith.mulf %86, %88 : vector<8x512xf32>
    %c48 = arith.constant 48 : index
    %c0_36 = arith.constant 0 : index
    %90 = vector.load %arg10[%c48, %c0_36] : memref<72x512xf32, #tpu.memory_space<vmem>>, vector<8x512xf32>
    tpu.vector_store %arg10[%c48, %c0_36], %89 {strides = array<i32>} : memref<72x512xf32, #tpu.memory_space<vmem>>, vector<8x512xf32>,
    %c448_i32 = arith.constant 448 : i32
    %91 = tpu.dynamic_rotate %58 by %c448_i32 dim 1 : vector<8x512xf32>, i32 -> vector<8x512xf32>
    %92 = vector.extract_strided_slice %59 {offsets = [7, 0], sizes = [1, 512], strides = [1, 1]} : vector<9x512xf32> to vector<1x512xf32>
    %93 = vector.broadcast %92 : vector<1x512xf32> to vector<8x512xf32>
    %94 = arith.mulf %91, %93 : vector<8x512xf32>
    %c56 = arith.constant 56 : index
    %c0_37 = arith.constant 0 : index
    %95 = vector.load %arg10[%c56, %c0_37] : memref<72x512xf32, #tpu.memory_space<vmem>>, vector<8x512xf32>
    tpu.vector_store %arg10[%c56, %c0_37], %94 {strides = array<i32>} : memref<72x512xf32, #tpu.memory_space<vmem>>, vector<8x512xf32>,
    %c444_i32 = arith.constant 444 : i32
    %96 = tpu.dynamic_rotate %58 by %c444_i32 dim 1 : vector<8x512xf32>, i32 -> vector<8x512xf32>
    %97 = vector.extract_strided_slice %59 {offsets = [8, 0], sizes = [1, 512], strides = [1, 1]} : vector<9x512xf32> to vector<1x512xf32>
    %98 = vector.broadcast %97 : vector<1x512xf32> to vector<8x512xf32>
    %99 = arith.mulf %96, %98 : vector<8x512xf32>
    %c64_38 = arith.constant 64 : index
    %c0_39 = arith.constant 0 : index
    %100 = vector.load %arg10[%c64_38, %c0_39] : memref<72x512xf32, #tpu.memory_space<vmem>>, vector<8x512xf32>
    tpu.vector_store %arg10[%c64_38, %c0_39], %99 {strides = array<i32>} : memref<72x512xf32, #tpu.memory_space<vmem>>, vector<8x512xf32>,
    %c0_40 = arith.constant 0 : index
    %c0_41 = arith.constant 0 : index
    %101 = vector.load %arg6[%c0_40, %c0_41] : memref<8x72xf32, #tpu.memory_space<vmem>>, vector<8x72xf32>
    %c0_42 = arith.constant 0 : index
    %c0_43 = arith.constant 0 : index
    %102 = vector.load %arg10[%c0_42, %c0_43] : memref<72x512xf32, #tpu.memory_space<vmem>>, vector<72x512xf32>
    %cst_44 = arith.constant dense<0.000000e+00> : vector<8x512xf32>
    %103 = tpu.matmul %101, %102, %cst_44 {dimension_numbers = #tpu.dot_dimension_numbers<[1], [0], [0], [1], [0, 0, 1, 1], [], []>} : vector<8x72xf32>, vector<72x512xf32>, vector<8x512xf32> -> vector<8x512xf32>
    %cst_45 = arith.constant dense<0.000000e+00> : vector<8xf32>
    %104 = vector.multi_reduction <add>, %103, %cst_45 [1] : vector<8x512xf32> to vector<8xf32>
    %105 = vector.shape_cast %104 : vector<8xf32> to vector<8x1xf32>
    %106 = arith.mulf %103, %103 : vector<8x512xf32>
    %cst_46 = arith.constant dense<0.000000e+00> : vector<8xf32>
    %107 = vector.multi_reduction <add>, %106, %cst_46 [1] : vector<8x512xf32> to vector<8xf32>
    %108 = vector.shape_cast %107 : vector<8xf32> to vector<8x1xf32>
    %cst_47 = arith.constant 0.001953125 : f32
    %109 = vector.broadcast %cst_47 : f32 to vector<8x1xf32>
    %110 = arith.mulf %105, %109 : vector<8x1xf32>
    %cst_48 = arith.constant 0.001953125 : f32
    %111 = vector.broadcast %cst_48 : f32 to vector<8x1xf32>
    %112 = arith.mulf %108, %111 : vector<8x1xf32>
    %113 = arith.mulf %110, %110 : vector<8x1xf32>
    %114 = arith.subf %112, %113 : vector<8x1xf32>
    %115 = vector.broadcast %110 : vector<8x1xf32> to vector<8x512xf32>
    %116 = arith.subf %103, %115 : vector<8x512xf32>
    %cst_49 = arith.constant 9.99999974E-6 : f32
    %117 = vector.broadcast %cst_49 : f32 to vector<8x1xf32>
    %118 = arith.addf %114, %117 : vector<8x1xf32>
    %119 = math.rsqrt %118 : vector<8x1xf32>
    %120 = vector.broadcast %119 : vector<8x1xf32> to vector<8x512xf32>
    %121 = arith.mulf %116, %120 : vector<8x512xf32>
    %cst_50 = arith.constant 0.000000e+00 : f32
    %122 = vector.broadcast %cst_50 : f32 to vector<8x512xf32>
    %123 = arith.maximumf %121, %122 : vector<8x512xf32>
    %c68_i32_51 = arith.constant 68 : i32
    %124 = tpu.dynamic_rotate %123 by %c68_i32_51 dim 1 : vector<8x512xf32>, i32 -> vector<8x512xf32>
    %125 = vector.extract_strided_slice %59 {offsets = [0, 0], sizes = [1, 512], strides = [1, 1]} : vector<9x512xf32> to vector<1x512xf32>
    %126 = vector.broadcast %125 : vector<1x512xf32> to vector<8x512xf32>
    %127 = arith.mulf %124, %126 : vector<8x512xf32>
    %c0_52 = arith.constant 0 : index
    %c0_53 = arith.constant 0 : index
    %128 = vector.load %arg10[%c0_52, %c0_53] : memref<72x512xf32, #tpu.memory_space<vmem>>, vector<8x512xf32>
    tpu.vector_store %arg10[%c0_52, %c0_53], %127 {strides = array<i32>} : memref<72x512xf32, #tpu.memory_space<vmem>>, vector<8x512xf32>,
    %c64_i32_54 = arith.constant 64 : i32
    %129 = tpu.dynamic_rotate %123 by %c64_i32_54 dim 1 : vector<8x512xf32>, i32 -> vector<8x512xf32>
    %130 = vector.extract_strided_slice %59 {offsets = [1, 0], sizes = [1, 512], strides = [1, 1]} : vector<9x512xf32> to vector<1x512xf32>
    %131 = vector.broadcast %130 : vector<1x512xf32> to vector<8x512xf32>
    %132 = arith.mulf %129, %131 : vector<8x512xf32>
    %c8_55 = arith.constant 8 : index
    %c0_56 = arith.constant 0 : index
    %133 = vector.load %arg10[%c8_55, %c0_56] : memref<72x512xf32, #tpu.memory_space<vmem>>, vector<8x512xf32>
    tpu.vector_store %arg10[%c8_55, %c0_56], %132 {strides = array<i32>} : memref<72x512xf32, #tpu.memory_space<vmem>>, vector<8x512xf32>,
    %c60_i32_57 = arith.constant 60 : i32
    %134 = tpu.dynamic_rotate %123 by %c60_i32_57 dim 1 : vector<8x512xf32>, i32 -> vector<8x512xf32>
    %135 = vector.extract_strided_slice %59 {offsets = [2, 0], sizes = [1, 512], strides = [1, 1]} : vector<9x512xf32> to vector<1x512xf32>
    %136 = vector.broadcast %135 : vector<1x512xf32> to vector<8x512xf32>
    %137 = arith.mulf %134, %136 : vector<8x512xf32>
    %c16_58 = arith.constant 16 : index
    %c0_59 = arith.constant 0 : index
    %138 = vector.load %arg10[%c16_58, %c0_59] : memref<72x512xf32, #tpu.memory_space<vmem>>, vector<8x512xf32>
    tpu.vector_store %arg10[%c16_58, %c0_59], %137 {strides = array<i32>} : memref<72x512xf32, #tpu.memory_space<vmem>>, vector<8x512xf32>,
    %c4_i32_60 = arith.constant 4 : i32
    %139 = tpu.dynamic_rotate %123 by %c4_i32_60 dim 1 : vector<8x512xf32>, i32 -> vector<8x512xf32>
    %140 = vector.extract_strided_slice %59 {offsets = [3, 0], sizes = [1, 512], strides = [1, 1]} : vector<9x512xf32> to vector<1x512xf32>
    %141 = vector.broadcast %140 : vector<1x512xf32> to vector<8x512xf32>
    %142 = arith.mulf %139, %141 : vector<8x512xf32>
    %c24_61 = arith.constant 24 : index
    %c0_62 = arith.constant 0 : index
    %143 = vector.load %arg10[%c24_61, %c0_62] : memref<72x512xf32, #tpu.memory_space<vmem>>, vector<8x512xf32>
    tpu.vector_store %arg10[%c24_61, %c0_62], %142 {strides = array<i32>} : memref<72x512xf32, #tpu.memory_space<vmem>>, vector<8x512xf32>,
    %c32_63 = arith.constant 32 : index
    %c0_64 = arith.constant 0 : index
    %144 = vector.load %arg10[%c32_63, %c0_64] : memref<72x512xf32, #tpu.memory_space<vmem>>, vector<8x512xf32>
    tpu.vector_store %arg10[%c32_63, %c0_64], %123 {strides = array<i32>} : memref<72x512xf32, #tpu.memory_space<vmem>>, vector<8x512xf32>,
    %c508_i32_65 = arith.constant 508 : i32
    %145 = tpu.dynamic_rotate %123 by %c508_i32_65 dim 1 : vector<8x512xf32>, i32 -> vector<8x512xf32>
    %146 = vector.extract_strided_slice %59 {offsets = [5, 0], sizes = [1, 512], strides = [1, 1]} : vector<9x512xf32> to vector<1x512xf32>
    %147 = vector.broadcast %146 : vector<1x512xf32> to vector<8x512xf32>
    %148 = arith.mulf %145, %147 : vector<8x512xf32>
    %c40_66 = arith.constant 40 : index
    %c0_67 = arith.constant 0 : index
    %149 = vector.load %arg10[%c40_66, %c0_67] : memref<72x512xf32, #tpu.memory_space<vmem>>, vector<8x512xf32>
    tpu.vector_store %arg10[%c40_66, %c0_67], %148 {strides = array<i32>} : memref<72x512xf32, #tpu.memory_space<vmem>>, vector<8x512xf32>,
    %c452_i32_68 = arith.constant 452 : i32
    %150 = tpu.dynamic_rotate %123 by %c452_i32_68 dim 1 : vector<8x512xf32>, i32 -> vector<8x512xf32>
    %151 = vector.extract_strided_slice %59 {offsets = [6, 0], sizes = [1, 512], strides = [1, 1]} : vector<9x512xf32> to vector<1x512xf32>
    %152 = vector.broadcast %151 : vector<1x512xf32> to vector<8x512xf32>
    %153 = arith.mulf %150, %152 : vector<8x512xf32>
    %c48_69 = arith.constant 48 : index
    %c0_70 = arith.constant 0 : index
    %154 = vector.load %arg10[%c48_69, %c0_70] : memref<72x512xf32, #tpu.memory_space<vmem>>, vector<8x512xf32>
    tpu.vector_store %arg10[%c48_69, %c0_70], %153 {strides = array<i32>} : memref<72x512xf32, #tpu.memory_space<vmem>>, vector<8x512xf32>,
    %c448_i32_71 = arith.constant 448 : i32
    %155 = tpu.dynamic_rotate %123 by %c448_i32_71 dim 1 : vector<8x512xf32>, i32 -> vector<8x512xf32>
    %156 = vector.extract_strided_slice %59 {offsets = [7, 0], sizes = [1, 512], strides = [1, 1]} : vector<9x512xf32> to vector<1x512xf32>
    %157 = vector.broadcast %156 : vector<1x512xf32> to vector<8x512xf32>
    %158 = arith.mulf %155, %157 : vector<8x512xf32>
    %c56_72 = arith.constant 56 : index
    %c0_73 = arith.constant 0 : index
    %159 = vector.load %arg10[%c56_72, %c0_73] : memref<72x512xf32, #tpu.memory_space<vmem>>, vector<8x512xf32>
    tpu.vector_store %arg10[%c56_72, %c0_73], %158 {strides = array<i32>} : memref<72x512xf32, #tpu.memory_space<vmem>>, vector<8x512xf32>,
    %c444_i32_74 = arith.constant 444 : i32
    %160 = tpu.dynamic_rotate %123 by %c444_i32_74 dim 1 : vector<8x512xf32>, i32 -> vector<8x512xf32>
    %161 = vector.extract_strided_slice %59 {offsets = [8, 0], sizes = [1, 512], strides = [1, 1]} : vector<9x512xf32> to vector<1x512xf32>
    %162 = vector.broadcast %161 : vector<1x512xf32> to vector<8x512xf32>
    %163 = arith.mulf %160, %162 : vector<8x512xf32>
    %c64_75 = arith.constant 64 : index
    %c0_76 = arith.constant 0 : index
    %164 = vector.load %arg10[%c64_75, %c0_76] : memref<72x512xf32, #tpu.memory_space<vmem>>, vector<8x512xf32>
    tpu.vector_store %arg10[%c64_75, %c0_76], %163 {strides = array<i32>} : memref<72x512xf32, #tpu.memory_space<vmem>>, vector<8x512xf32>,
    %c0_77 = arith.constant 0 : index
    %c0_78 = arith.constant 0 : index
    %165 = vector.load %arg7[%c0_77, %c0_78] : memref<8x72xf32, #tpu.memory_space<vmem>>, vector<8x72xf32>
    %c0_79 = arith.constant 0 : index
    %c0_80 = arith.constant 0 : index
    %166 = vector.load %arg10[%c0_79, %c0_80] : memref<72x512xf32, #tpu.memory_space<vmem>>, vector<72x512xf32>
    %cst_81 = arith.constant dense<0.000000e+00> : vector<8x512xf32>
    %167 = tpu.matmul %165, %166, %cst_81 {dimension_numbers = #tpu.dot_dimension_numbers<[1], [0], [0], [1], [0, 0, 1, 1], [], []>} : vector<8x72xf32>, vector<72x512xf32>, vector<8x512xf32> -> vector<8x512xf32>
    %cst_82 = arith.constant dense<0.000000e+00> : vector<8xf32>
    %168 = vector.multi_reduction <add>, %167, %cst_82 [1] : vector<8x512xf32> to vector<8xf32>
    %169 = vector.shape_cast %168 : vector<8xf32> to vector<8x1xf32>
    %170 = arith.mulf %167, %167 : vector<8x512xf32>
    %cst_83 = arith.constant dense<0.000000e+00> : vector<8xf32>
    %171 = vector.multi_reduction <add>, %170, %cst_83 [1] : vector<8x512xf32> to vector<8xf32>
    %172 = vector.shape_cast %171 : vector<8xf32> to vector<8x1xf32>
    %cst_84 = arith.constant 0.001953125 : f32
    %173 = vector.broadcast %cst_84 : f32 to vector<8x1xf32>
    %174 = arith.mulf %169, %173 : vector<8x1xf32>
    %cst_85 = arith.constant 0.001953125 : f32
    %175 = vector.broadcast %cst_85 : f32 to vector<8x1xf32>
    %176 = arith.mulf %172, %175 : vector<8x1xf32>
    %177 = arith.mulf %174, %174 : vector<8x1xf32>
    %178 = arith.subf %176, %177 : vector<8x1xf32>
    %179 = vector.broadcast %174 : vector<8x1xf32> to vector<8x512xf32>
    %180 = arith.subf %167, %179 : vector<8x512xf32>
    %cst_86 = arith.constant 9.99999974E-6 : f32
    %181 = vector.broadcast %cst_86 : f32 to vector<8x1xf32>
    %182 = arith.addf %178, %181 : vector<8x1xf32>
    %183 = math.rsqrt %182 : vector<8x1xf32>
    %184 = vector.broadcast %183 : vector<8x1xf32> to vector<8x512xf32>
    %185 = arith.mulf %180, %184 : vector<8x512xf32>
    %cst_87 = arith.constant 0.000000e+00 : f32
    %186 = vector.broadcast %cst_87 : f32 to vector<8x512xf32>
    %187 = arith.maximumf %185, %186 : vector<8x512xf32>
    %c0_88 = arith.constant 0 : index
    %c0_89 = arith.constant 0 : index
    %188 = vector.load %arg8[%c0_88, %c0_89] : memref<8x1xf32, #tpu.memory_space<vmem>>, vector<8x1xf32>
    %189 = vector.broadcast %188 : vector<8x1xf32> to vector<8x512xf32>
    %190 = arith.mulf %189, %187 : vector<8x512xf32>
    %cst_90 = arith.constant dense<0.000000e+00> : vector<512xf32>
    %191 = vector.multi_reduction <add>, %190, %cst_90 [0] : vector<8x512xf32> to vector<512xf32>
    %192 = vector.shape_cast %191 : vector<512xf32> to vector<1x512xf32>
    %cst_91 = arith.constant dense<0.000000e+00> : vector<1xf32>
    %193 = vector.multi_reduction <add>, %192, %cst_91 [1] : vector<1x512xf32> to vector<1xf32>
    %194 = vector.shape_cast %193 : vector<1xf32> to vector<1x1xf32>
    %195 = arith.mulf %192, %192 : vector<1x512xf32>
    %cst_92 = arith.constant dense<0.000000e+00> : vector<1xf32>
    %196 = vector.multi_reduction <add>, %195, %cst_92 [1] : vector<1x512xf32> to vector<1xf32>
    %197 = vector.shape_cast %196 : vector<1xf32> to vector<1x1xf32>
    %cst_93 = arith.constant 0.001953125 : f32
    %198 = vector.broadcast %cst_93 : f32 to vector<1x1xf32>
    %199 = arith.mulf %194, %198 : vector<1x1xf32>
    %cst_94 = arith.constant 0.001953125 : f32
    %200 = vector.broadcast %cst_94 : f32 to vector<1x1xf32>
    %201 = arith.mulf %197, %200 : vector<1x1xf32>
    %202 = arith.mulf %199, %199 : vector<1x1xf32>
    %203 = arith.subf %201, %202 : vector<1x1xf32>
    %204 = vector.broadcast %199 : vector<1x1xf32> to vector<1x512xf32>
    %205 = arith.subf %192, %204 : vector<1x512xf32>
    %cst_95 = arith.constant 9.99999974E-6 : f32
    %206 = vector.broadcast %cst_95 : f32 to vector<1x1xf32>
    %207 = arith.addf %203, %206 : vector<1x1xf32>
    %208 = math.rsqrt %207 : vector<1x1xf32>
    %209 = vector.broadcast %208 : vector<1x1xf32> to vector<1x512xf32>
    %210 = arith.mulf %205, %209 : vector<1x512xf32>
    %cst_96 = arith.constant 0.000000e+00 : f32
    %211 = vector.broadcast %cst_96 : f32 to vector<1x512xf32>
    %212 = arith.maximumf %210, %211 : vector<1x512xf32>
    %213 = vector.extract_strided_slice %36 {offsets = [0, 0], sizes = [64, 1], strides = [1, 1]} : vector<64x2xf32> to vector<64x1xf32>
    %214 = vector.extract_strided_slice %212 {offsets = [0, 0], sizes = [1, 256], strides = [1, 1]} : vector<1x512xf32> to vector<1x256xf32>
    %215 = vector.broadcast %213 : vector<64x1xf32> to vector<64x256xf32>
    %216 = vector.broadcast %214 : vector<1x256xf32> to vector<64x256xf32>
    %217 = arith.addf %215, %216 : vector<64x256xf32>
    %cst_97 = arith.constant 5.000000e-01 : f32
    %218 = vector.broadcast %cst_97 : f32 to vector<64x256xf32>
    %219 = arith.mulf %218, %217 : vector<64x256xf32>
    %220 = math.tanh %219 : vector<64x256xf32>
    %cst_98 = arith.constant 5.000000e-01 : f32
    %221 = vector.broadcast %cst_98 : f32 to vector<64x256xf32>
    %222 = arith.mulf %221, %220 : vector<64x256xf32>
    %cst_99 = arith.constant 1.500000e+00 : f32
    %223 = vector.broadcast %cst_99 : f32 to vector<64x256xf32>
    %224 = arith.addf %223, %222 : vector<64x256xf32>
    %225 = arith.mulf %0, %224 : vector<64x256xf32>
    %c0_100 = arith.constant 0 : index
    %c0_101 = arith.constant 0 : index
    %226 = vector.load %arg9[%c0_100, %c0_101] : memref<128x256xf32, #tpu.memory_space<vmem>>, vector<64x256xf32>
    tpu.vector_store %arg9[%c0_100, %c0_101], %225 {strides = array<i32>} : memref<128x256xf32, #tpu.memory_space<vmem>>, vector<64x256xf32>,
    %227 = vector.extract_strided_slice %36 {offsets = [0, 1], sizes = [64, 1], strides = [1, 1]} : vector<64x2xf32> to vector<64x1xf32>
    %228 = vector.extract_strided_slice %212 {offsets = [0, 256], sizes = [1, 256], strides = [1, 1]} : vector<1x512xf32> to vector<1x256xf32>
    %229 = vector.broadcast %227 : vector<64x1xf32> to vector<64x256xf32>
    %230 = vector.broadcast %228 : vector<1x256xf32> to vector<64x256xf32>
    %231 = arith.addf %229, %230 : vector<64x256xf32>
    %cst_102 = arith.constant 5.000000e-01 : f32
    %232 = vector.broadcast %cst_102 : f32 to vector<64x256xf32>
    %233 = arith.mulf %232, %231 : vector<64x256xf32>
    %234 = math.tanh %233 : vector<64x256xf32>
    %cst_103 = arith.constant 5.000000e-01 : f32
    %235 = vector.broadcast %cst_103 : f32 to vector<64x256xf32>
    %236 = arith.mulf %235, %234 : vector<64x256xf32>
    %cst_104 = arith.constant 1.500000e+00 : f32
    %237 = vector.broadcast %cst_104 : f32 to vector<64x256xf32>
    %238 = arith.addf %237, %236 : vector<64x256xf32>
    %239 = arith.mulf %1, %238 : vector<64x256xf32>
    %c64_105 = arith.constant 64 : index
    %c0_106 = arith.constant 0 : index
    %240 = vector.load %arg9[%c64_105, %c0_106] : memref<128x256xf32, #tpu.memory_space<vmem>>, vector<64x256xf32>
    tpu.vector_store %arg9[%c64_105, %c0_106], %239 {strides = array<i32>} : memref<128x256xf32, #tpu.memory_space<vmem>>, vector<64x256xf32>,
    return
  }
}

</mosaic_0001>

<llo_original>
// kernel: tpu_custom_call.1
$region0: #{tpu_custom_call.1}
  #allocation0 [shape = 'u32[]', space=smem, size = 0x4, offset = 0x4, fixed_abs, tag = 'smem constant byte address 0x4 - core index']
  #allocation1 [shape = 'u32[144,128]{1,0:T(1,128)}', space=vmem, size = 0x12000, scoped, tag = 'internal scratch']
  #allocation2 [shape = 'f32[72,512]{1,0:T(8,128)}', space=vmem, size = 0x24000, scoped, tag = 'scratch operand']
  %s0 = inlined_call_operand.hbm [shape: f32[128,256], index: 0, kind: input, shape index: {}]
  %s1 = inlined_call_operand.vmem [shape: f32[9,512], index: 1, kind: input, shape index: {}]
  %s2 = inlined_call_operand.vmem [shape: f32[8,64], index: 2, kind: input, shape index: {}]
  %s3 = inlined_call_operand.vmem [shape: f32[64,8], index: 3, kind: input, shape index: {}]
  %s4 = inlined_call_operand.vmem [shape: f32[64,1], index: 4, kind: input, shape index: {}]
  %s5 = inlined_call_operand.vmem [shape: f32[8,64], index: 5, kind: input, shape index: {}]
  %s6 = inlined_call_operand.vmem [shape: f32[8,72], index: 6, kind: input, shape index: {}]
  %s7 = inlined_call_operand.vmem [shape: f32[8,72], index: 7, kind: input, shape index: {}]
  %s8 = inlined_call_operand.vmem [shape: f32[8,1], index: 8, kind: input, shape index: {}]
  %s9 = inlined_call_operand.hbm [shape: f32[128,256], index: 9, kind: output, shape index: {}]
  %s10 = sld [smem:[#allocation0]]
  $region50: #{tpu_custom_call.1} parent=0
    _
  %s12 = ssub.s32 1, %s10
  %s13 = scalar_select 0, %s12, %s10
  $region1: #{tpu_custom_call.1} parent=0
    #allocation3 [shape = 'u8[131072]{0}', space=vmem, size = 0x20000, scoped, tag = 'input window, operand 0, single buffered']
    #allocation4 [shape = 's32[1]{0}', space=sflag, size = 0x4, scoped, tag = 'scoped memory for tpu_custom_call.1']
    #allocation5 [shape = 's32[1]{0}', space=sflag, size = 0x4, scoped, tag = 'scoped memory for tpu_custom_call.1']
    #allocation6 [shape = 'u8[131072]{0}', space=vmem, size = 0x20000, scoped, tag = 'output window, operand 0, single buffered']
    %14 = vsyncpa [#allocation4], 0
    %15 = vsyncpa [#allocation5], 0
    // Predicated region
    $region2: #{tpu_custom_call.1} parent=1 // pred_check
      _
    $region3: #{tpu_custom_call.1} parent=1 // pred_check_branch
      %17 = sbr.rel (0) target = $region5
    $region4: #{tpu_custom_call.1} parent=1 // pred_region
      %s19 = ssub.s32 4096, 4096
      %20 = vsyncadd [#allocation4], %s19
      %s21 = sshll.u32 [#allocation3], 4
      %s22 = int_to_ptr.vmem [resolvable:$true] %s21
      %27 = dma.hbm_to_vmem [thread:$0]  %s0, 4096, %s22, [#allocation4], 256, 256, 16
    $region5: #{tpu_custom_call.1} parent=1 // pred_fallthru
      _
    // Predicated region
    $region6: #{tpu_custom_call.1} parent=1 // pred_check
      _
    $region7: #{tpu_custom_call.1} parent=1 // pred_check_branch
      %29 = sbr.rel (0) target = $region9
    $region8: #{tpu_custom_call.1} parent=1 // pred_region
      _
    $region9: #{tpu_custom_call.1} parent=1 // pred_fallthru
      _
    // Predicated region
    $region10: #{tpu_custom_call.1} parent=1 // pred_check
      _
    $region11: #{tpu_custom_call.1} parent=1 // pred_check_branch
      %31 = sbr.rel (0) target = $region13
    $region12: #{tpu_custom_call.1} parent=1 // pred_region
      _
    $region13: #{tpu_custom_call.1} parent=1 // pred_fallthru
      _
    // Predicated region
    $region14: #{tpu_custom_call.1} parent=1 // pred_check
      _
    $region15: #{tpu_custom_call.1} parent=1 // pred_check_branch
      %33 = sbr.rel (0) target = $region17
    $region16: #{tpu_custom_call.1} parent=1 // pred_region
      _
    $region17: #{tpu_custom_call.1} parent=1 // pred_fallthru
      _
    // Predicated region
    $region18: #{tpu_custom_call.1} parent=1 // pred_check
      _
    $region19: #{tpu_custom_call.1} parent=1 // pred_check_branch
      %35 = sbr.rel (0) target = $region21
    $region20: #{tpu_custom_call.1} parent=1 // pred_region
      _
    $region21: #{tpu_custom_call.1} parent=1 // pred_fallthru
      _
    // Predicated region
    $region22: #{tpu_custom_call.1} parent=1 // pred_check
      _
    $region23: #{tpu_custom_call.1} parent=1 // pred_check_branch
      %37 = sbr.rel (0) target = $region25
    $region24: #{tpu_custom_call.1} parent=1 // pred_region
      _
    $region25: #{tpu_custom_call.1} parent=1 // pred_fallthru
      _
    // Predicated region
    $region26: #{tpu_custom_call.1} parent=1 // pred_check
      _
    $region27: #{tpu_custom_call.1} parent=1 // pred_check_branch
      %39 = sbr.rel (0) target = $region29
    $region28: #{tpu_custom_call.1} parent=1 // pred_region
      _
    $region29: #{tpu_custom_call.1} parent=1 // pred_fallthru
      _
    // Predicated region
    $region30: #{tpu_custom_call.1} parent=1 // pred_check
      _
    $region31: #{tpu_custom_call.1} parent=1 // pred_check_branch
      %41 = sbr.rel (0) target = $region33
    $region32: #{tpu_custom_call.1} parent=1 // pred_region
      _
    $region33: #{tpu_custom_call.1} parent=1 // pred_fallthru
      _
    // Predicated region
    $region34: #{tpu_custom_call.1} parent=1 // pred_check
      _
    $region35: #{tpu_custom_call.1} parent=1 // pred_check_branch
      %43 = sbr.rel (0) target = $region37
    $region36: #{tpu_custom_call.1} parent=1 // pred_region
      _
    $region37: #{tpu_custom_call.1} parent=1 // pred_fallthru
      _
    // Predicated region
    $region38: #{tpu_custom_call.1} parent=1 // pred_check
      _
    $region39: #{tpu_custom_call.1} parent=1 // pred_check_branch
      %45 = sbr.rel (0) target = $region41
    $region40: #{tpu_custom_call.1} parent=1 // pred_region
      %46 = dma.done [#allocation4], 4096
    $region41: #{tpu_custom_call.1} parent=1 // pred_fallthru
      _
    %v47 = vld [vmem:[#allocation3] sm:$0xff]
    %v48 = vld [vmem:[#allocation3 + $0x8] sm:$0xff]
    %v49 = vld [vmem:[#allocation3 + $0x10] sm:$0xff]
    %v50 = vld [vmem:[#allocation3 + $0x18] sm:$0xff]
    %v51 = vld [vmem:[#allocation3 + $0x20] sm:$0xff]
    %v52 = vld [vmem:[#allocation3 + $0x28] sm:$0xff]
    %v53 = vld [vmem:[#allocation3 + $0x30] sm:$0xff]
    %v54 = vld [vmem:[#allocation3 + $0x38] sm:$0xff]
    %v55 = vld [vmem:[#allocation3 + $0x40] sm:$0xff]
    %v56 = vld [vmem:[#allocation3 + $0x48] sm:$0xff]
    %v57 = vld [vmem:[#allocation3 + $0x50] sm:$0xff]
    %v58 = vld [vmem:[#allocation3 + $0x58] sm:$0xff]
    %v59 = vld [vmem:[#allocation3 + $0x60] sm:$0xff]
    %v60 = vld [vmem:[#allocation3 + $0x68] sm:$0xff]
    %v61 = vld [vmem:[#allocation3 + $0x70] sm:$0xff]
    %v62 = vld [vmem:[#allocation3 + $0x78] sm:$0xff]
    %v63 = vld [vmem:[#allocation3 + $0x80] sm:$0xff]
    %v64 = vld [vmem:[#allocation3 + $0x88] sm:$0xff]
    %v65 = vld [vmem:[#allocation3 + $0x90] sm:$0xff]
    %v66 = vld [vmem:[#allocation3 + $0x98] sm:$0xff]
    %v67 = vld [vmem:[#allocation3 + $0xa0] sm:$0xff]
    %v68 = vld [vmem:[#allocation3 + $0xa8] sm:$0xff]
    %v69 = vld [vmem:[#allocation3 + $0xb0] sm:$0xff]
    %v70 = vld [vmem:[#allocation3 + $0xb8] sm:$0xff]
    %v71 = vld [vmem:[#allocation3 + $0xc0] sm:$0xff]
    %v72 = vld [vmem:[#allocation3 + $0xc8] sm:$0xff]
    %v73 = vld [vmem:[#allocation3 + $0xd0] sm:$0xff]
    %v74 = vld [vmem:[#allocation3 + $0xd8] sm:$0xff]
    %v75 = vld [vmem:[#allocation3 + $0xe0] sm:$0xff]
    %v76 = vld [vmem:[#allocation3 + $0xe8] sm:$0xff]
    %v77 = vld [vmem:[#allocation3 + $0xf0] sm:$0xff]
    %v78 = vld [vmem:[#allocation3 + $0xf8] sm:$0xff]
    %v79 = vadd.f32 %v47, %v48
    %80 = vadd.xlane.f32.xlu0 %v79
    %v81 = vpop.xlane.xlu0 %80
    %v82 = vadd.f32 %v49, %v50
    %83 = vadd.xlane.f32.xlu0 %v82
    %v84 = vpop.xlane.xlu0 %83
    %v85 = vadd.f32 %v51, %v52
    %86 = vadd.xlane.f32.xlu0 %v85
    %v87 = vpop.xlane.xlu0 %86
    %v88 = vadd.f32 %v53, %v54
    %89 = vadd.xlane.f32.xlu0 %v88
    %v90 = vpop.xlane.xlu0 %89
    %v91 = vadd.f32 %v55, %v56
    %92 = vadd.xlane.f32.xlu0 %v91
    %v93 = vpop.xlane.xlu0 %92
    %v94 = vadd.f32 %v57, %v58
    %95 = vadd.xlane.f32.xlu0 %v94
    %v96 = vpop.xlane.xlu0 %95
    %v97 = vadd.f32 %v59, %v60
    %98 = vadd.xlane.f32.xlu0 %v97
    %v99 = vpop.xlane.xlu0 %98
    %v100 = vadd.f32 %v61, %v62
    %101 = vadd.xlane.f32.xlu0 %v100
    %v102 = vpop.xlane.xlu0 %101
    %v103 = vadd.f32 %v63, %v64
    %104 = vadd.xlane.f32.xlu0 %v103
    %v105 = vpop.xlane.xlu0 %104
    %v106 = vadd.f32 %v65, %v66
    %107 = vadd.xlane.f32.xlu0 %v106
    %v108 = vpop.xlane.xlu0 %107
    %v109 = vadd.f32 %v67, %v68
    %110 = vadd.xlane.f32.xlu0 %v109
    %v111 = vpop.xlane.xlu0 %110
    %v112 = vadd.f32 %v69, %v70
    %113 = vadd.xlane.f32.xlu0 %v112
    %v114 = vpop.xlane.xlu0 %113
    %v115 = vadd.f32 %v71, %v72
    %116 = vadd.xlane.f32.xlu0 %v115
    %v117 = vpop.xlane.xlu0 %116
    %v118 = vadd.f32 %v73, %v74
    %119 = vadd.xlane.f32.xlu0 %v118
    %v120 = vpop.xlane.xlu0 %119
    %v121 = vadd.f32 %v75, %v76
    %122 = vadd.xlane.f32.xlu0 %v121
    %v123 = vpop.xlane.xlu0 %122
    %v124 = vadd.f32 %v77, %v78
    %125 = vadd.xlane.f32.xlu0 %v124
    %v126 = vpop.xlane.xlu0 %125
    %vm127 = vcmask 7168
    %v128 = vsel %vm127, %v81, %v105
    %v129 = vsel %vm127, %v84, %v108
    %v130 = vsel %vm127, %v87, %v111
    %v131 = vsel %vm127, %v90, %v114
    %v132 = vsel %vm127, %v93, %v117
    %v133 = vsel %vm127, %v96, %v120
    %v134 = vsel %vm127, %v99, %v123
    %v135 = vsel %vm127, %v102, %v126
    %v136 = vmul.f32 %v128, 0.00390625
    %v137 = vmul.f32 %v129, 0.00390625
    %v138 = vmul.f32 %v130, 0.00390625
    %v139 = vmul.f32 %v131, 0.00390625
    %v140 = vmul.f32 %v132, 0.00390625
    %v141 = vmul.f32 %v133, 0.00390625
    %v142 = vmul.f32 %v134, 0.00390625
    %v143 = vmul.f32 %v135, 0.00390625
    %v144 = vld [vmem:[%s2] sm:$0xff]
    %vm145 = vcmask 523264
    %v147 = vsel %vm145, %v144, 0
    %149 = vmatprep.subr.mxu0 0.0
    %150 = vmatpush1.msra.mxu0 %v136
    %151 = vmatprep.subr.mxu0 0.0
    %152 = vmatpush1.msra.mxu0 %v137
    %153 = vmatprep.subr.mxu0 0.0
    %154 = vmatpush1.msra.mxu0 %v138
    %155 = vmatprep.subr.mxu0 0.0
    %156 = vmatpush1.msra.mxu0 %v139
    %157 = vmatprep.subr.mxu0 0.0
    %158 = vmatpush1.msra.mxu0 %v140
    %159 = vmatprep.subr.mxu0 0.0
    %160 = vmatpush1.msra.mxu0 %v141
    %161 = vmatprep.subr.mxu0 0.0
    %162 = vmatpush1.msra.mxu0 %v142
    %163 = vmatprep.subr.mxu0 0.0
    %164 = vmatpush1.msra.mxu0 %v143
    %165 = vmatprep.subr.mxu0 0.0
    %166 = vmatpush1.msra.mxu0 0.0
    %167 = vmatprep.subr.mxu0 0.0
    %168 = vmatpush1.msra.mxu0 0.0
    %169 = vmatprep.subr.mxu0 0.0
    %170 = vmatpush1.msra.mxu0 0.0
    %171 = vmatprep.subr.mxu0 0.0
    %172 = vmatpush1.msra.mxu0 0.0
    %173 = vmatprep.subr.mxu0 0.0
    %174 = vmatpush1.msra.mxu0 0.0
    %175 = vmatprep.subr.mxu0 0.0
    %176 = vmatpush1.msra.mxu0 0.0
    %177 = vmatprep.subr.mxu0 0.0
    %178 = vmatpush1.msra.mxu0 0.0
    %179 = vmatprep.subr.mxu0 0.0
    %180 = vmatpush1.msra.mxu0 0.0
    %181 = vmatprep.subr.mxu0 0.0
    %182 = vmatpush1.msra.mxu0 0.0
    %183 = vmatprep.subr.mxu0 0.0
    %184 = vmatpush1.msra.mxu0 0.0
    %185 = vmatprep.subr.mxu0 0.0
    %186 = vmatpush1.msra.mxu0 0.0
    %187 = vmatprep.subr.mxu0 0.0
    %188 = vmatpush1.msra.mxu0 0.0
    %189 = vmatprep.subr.mxu0 0.0
    %190 = vmatpush1.msra.mxu0 0.0
    %191 = vmatprep.subr.mxu0 0.0
    %192 = vmatpush1.msra.mxu0 0.0
    %193 = vmatprep.subr.mxu0 0.0
    %194 = vmatpush1.msra.mxu0 0.0
    %195 = vmatprep.subr.mxu0 0.0
    %196 = vmatpush1.msra.mxu0 0.0
    %197 = vmatprep.subr.mxu0 0.0
    %198 = vmatpush1.msra.mxu0 0.0
    %199 = vmatprep.subr.mxu0 0.0
    %200 = vmatpush1.msra.mxu0 0.0
    %201 = vmatprep.subr.mxu0 0.0
    %202 = vmatpush1.msra.mxu0 0.0
    %203 = vmatprep.subr.mxu0 0.0
    %204 = vmatpush1.msra.mxu0 0.0
    %205 = vmatprep.subr.mxu0 0.0
    %206 = vmatpush1.msra.mxu0 0.0
    %207 = vmatprep.subr.mxu0 0.0
    %208 = vmatpush1.msra.mxu0 0.0
    %209 = vmatprep.subr.mxu0 0.0
    %210 = vmatpush1.msra.mxu0 0.0
    %211 = vmatprep.subr.mxu0 0.0
    %212 = vmatpush1.msra.mxu0 0.0
    %213 = vmatprep.mubr.f32.mxu0 0.0
    %214 = vmatmul.mubr.f32.gmra.mrb[0].mxu0 %v147
    %v215 = vpop.f32.mrb[0].mxu0
    %v216 = vadd.f32 0.0, %v215
    %v217 = vpop.f32.mrb[0].mxu0
    %218 = vdwg.mxu0
    %vm219 = vcmask 15360
    %v220 = vsel %vm219, %v216, 0.0
    %221 = vadd.xlane.f32.xlu0 %v220
    %v222 = vpop.xlane.xlu0 %221
    %v223 = vmul.f32 %v216, %v216
    %v224 = vsel %vm219, %v223, 0.0
    %225 = vadd.xlane.f32.xlu0 %v224
    %v226 = vpop.xlane.xlu0 %225
    %v227 = vmul.f32 %v222, 0.5
    %v228 = vmul.f32 %v226, 0.5
    %v229 = vmul.f32 %v227, %v227
    %v230 = vsub.f32 %v228, %v229
    %v231 = vsub.f32 %v216, %v227
    %v232 = vadd.f32 %v230, 1e-05
    %v233 = vrsqrt.pop %v232
    %v234 = vmul.f32 %v231, %v233
    %v235 = vmax.f32 %v234, 0.0
    %v236 = vld [vmem:[%s3] sm:$0xff]
    %v237 = vld [vmem:[%s3 + $0x8] sm:$0xff]
    %v238 = vld [vmem:[%s3 + $0x10] sm:$0xff]
    %v239 = vld [vmem:[%s3 + $0x18] sm:$0xff]
    %v240 = vld [vmem:[%s3 + $0x20] sm:$0xff]
    %v241 = vld [vmem:[%s3 + $0x28] sm:$0xff]
    %v242 = vld [vmem:[%s3 + $0x30] sm:$0xff]
    %v243 = vld [vmem:[%s3 + $0x38] sm:$0xff]
    %v244 = vld [vmem:[%s4] sm:$0xff]
    %v245 = vld [vmem:[%s4 + $0x8] sm:$0xff]
    %v246 = vld [vmem:[%s4 + $0x10] sm:$0xff]
    %v247 = vld [vmem:[%s4 + $0x18] sm:$0xff]
    %v248 = vld [vmem:[%s4 + $0x20] sm:$0xff]
    %v249 = vld [vmem:[%s4 + $0x28] sm:$0xff]
    %v250 = vld [vmem:[%s4 + $0x30] sm:$0xff]
    %v251 = vld [vmem:[%s4 + $0x38] sm:$0xff]
    %253 = vset.pattern.permute.xlu0 0
    %254 = vperm.xlu0 %253, %v244
    %v255 = vpop.permute.xlu0 %254
    %258 = vset.pattern.permute.xlu0 0
    %259 = vperm.xlu0 %258, %v245
    %v260 = vpop.permute.xlu0 %259
    %263 = vset.pattern.permute.xlu0 0
    %264 = vperm.xlu0 %263, %v246
    %v265 = vpop.permute.xlu0 %264
    %268 = vset.pattern.permute.xlu0 0
    %269 = vperm.xlu0 %268, %v247
    %v270 = vpop.permute.xlu0 %269
    %273 = vset.pattern.permute.xlu0 0
    %274 = vperm.xlu0 %273, %v248
    %v275 = vpop.permute.xlu0 %274
    %278 = vset.pattern.permute.xlu0 0
    %279 = vperm.xlu0 %278, %v249
    %v280 = vpop.permute.xlu0 %279
    %283 = vset.pattern.permute.xlu0 0
    %284 = vperm.xlu0 %283, %v250
    %v285 = vpop.permute.xlu0 %284
    %288 = vset.pattern.permute.xlu0 0
    %289 = vperm.xlu0 %288, %v251
    %v290 = vpop.permute.xlu0 %289
    %vm292 = vcmask 64512
    %v294 = vsel %vm292, %v236, 0
    %v297 = vsel %vm292, %v237, 0
    %v300 = vsel %vm292, %v238, 0
    %v303 = vsel %vm292, %v239, 0
    %v306 = vsel %vm292, %v240, 0
    %v309 = vsel %vm292, %v241, 0
    %v312 = vsel %vm292, %v242, 0
    %v315 = vsel %vm292, %v243, 0
    %317 = vmatprep.subr.mxu0 0.0
    %318 = vmatpush1.msra.mxu0 %v235
    %319 = vmatprep.subr.mxu0 0.0
    %320 = vmatpush1.msra.mxu0 0.0
    %321 = vmatprep.subr.mxu0 0.0
    %322 = vmatpush1.msra.mxu0 0.0
    %323 = vmatprep.subr.mxu0 0.0
    %324 = vmatpush1.msra.mxu0 0.0
    %325 = vmatprep.subr.mxu0 0.0
    %326 = vmatpush1.msra.mxu0 0.0
    %327 = vmatprep.subr.mxu0 0.0
    %328 = vmatpush1.msra.mxu0 0.0
    %329 = vmatprep.subr.mxu0 0.0
    %330 = vmatpush1.msra.mxu0 0.0
    %331 = vmatprep.subr.mxu0 0.0
    %332 = vmatpush1.msra.mxu0 0.0
    %333 = vmatprep.subr.mxu0 0.0
    %334 = vmatpush1.msra.mxu0 0.0
    %335 = vmatprep.subr.mxu0 0.0
    %336 = vmatpush1.msra.mxu0 0.0
    %337 = vmatprep.subr.mxu0 0.0
    %338 = vmatpush1.msra.mxu0 0.0
    %339 = vmatprep.subr.mxu0 0.0
    %340 = vmatpush1.msra.mxu0 0.0
    %341 = vmatprep.subr.mxu0 0.0
    %342 = vmatpush1.msra.mxu0 0.0
    %343 = vmatprep.subr.mxu0 0.0
    %344 = vmatpush1.msra.mxu0 0.0
    %345 = vmatprep.subr.mxu0 0.0
    %346 = vmatpush1.msra.mxu0 0.0
    %347 = vmatprep.subr.mxu0 0.0
    %348 = vmatpush1.msra.mxu0 0.0
    %349 = vmatprep.subr.mxu0 0.0
    %350 = vmatpush1.msra.mxu0 0.0
    %351 = vmatprep.subr.mxu0 0.0
    %352 = vmatpush1.msra.mxu0 0.0
    %353 = vmatprep.subr.mxu0 0.0
    %354 = vmatpush1.msra.mxu0 0.0
    %355 = vmatprep.subr.mxu0 0.0
    %356 = vmatpush1.msra.mxu0 0.0
    %357 = vmatprep.subr.mxu0 0.0
    %358 = vmatpush1.msra.mxu0 0.0
    %359 = vmatprep.subr.mxu0 0.0
    %360 = vmatpush1.msra.mxu0 0.0
    %361 = vmatprep.subr.mxu0 0.0
    %362 = vmatpush1.msra.mxu0 0.0
    %363 = vmatprep.subr.mxu0 0.0
    %364 = vmatpush1.msra.mxu0 0.0
    %365 = vmatprep.subr.mxu0 0.0
    %366 = vmatpush1.msra.mxu0 0.0
    %367 = vmatprep.subr.mxu0 0.0
    %368 = vmatpush1.msra.mxu0 0.0
    %369 = vmatprep.subr.mxu0 0.0
    %370 = vmatpush1.msra.mxu0 0.0
    %371 = vmatprep.subr.mxu0 0.0
    %372 = vmatpush1.msra.mxu0 0.0
    %373 = vmatprep.subr.mxu0 0.0
    %374 = vmatpush1.msra.mxu0 0.0
    %375 = vmatprep.subr.mxu0 0.0
    %376 = vmatpush1.msra.mxu0 0.0
    %377 = vmatprep.subr.mxu0 0.0
    %378 = vmatpush1.msra.mxu0 0.0
    %379 = vmatprep.subr.mxu0 0.0
    %380 = vmatpush1.msra.mxu0 0.0
    %381 = vmatprep.mubr.f32.mxu0 0.0
    %382 = vmatmul.mubr.f32.gmra.mrb[0].mxu0 %v294
    %v383 = vpop.f32.mrb[0].mxu0
    %v384 = vadd.f32 %v255, %v383
    %v385 = vpop.f32.mrb[0].mxu0
    %386 = vmatprep.mubr.f32.mxu0 0.0
    %387 = vmatmul.mubr.f32.gmra.mrb[0].mxu0 %v297
    %v388 = vpop.f32.mrb[0].mxu0
    %v389 = vadd.f32 %v260, %v388
    %v390 = vpop.f32.mrb[0].mxu0
    %391 = vmatprep.mubr.f32.mxu0 0.0
    %392 = vmatmul.mubr.f32.gmra.mrb[0].mxu0 %v300
    %v393 = vpop.f32.mrb[0].mxu0
    %v394 = vadd.f32 %v265, %v393
    %v395 = vpop.f32.mrb[0].mxu0
    %396 = vmatprep.mubr.f32.mxu0 0.0
    %397 = vmatmul.mubr.f32.gmra.mrb[0].mxu0 %v303
    %v398 = vpop.f32.mrb[0].mxu0
    %v399 = vadd.f32 %v270, %v398
    %v400 = vpop.f32.mrb[0].mxu0
    %401 = vmatprep.mubr.f32.mxu0 0.0
    %402 = vmatmul.mubr.f32.gmra.mrb[0].mxu0 %v306
    %v403 = vpop.f32.mrb[0].mxu0
    %v404 = vadd.f32 %v275, %v403
    %v405 = vpop.f32.mrb[0].mxu0
    %406 = vmatprep.mubr.f32.mxu0 0.0
    %407 = vmatmul.mubr.f32.gmra.mrb[0].mxu0 %v309
    %v408 = vpop.f32.mrb[0].mxu0
    %v409 = vadd.f32 %v280, %v408
    %v410 = vpop.f32.mrb[0].mxu0
    %411 = vmatprep.mubr.f32.mxu0 0.0
    %412 = vmatmul.mubr.f32.gmra.mrb[0].mxu0 %v312
    %v413 = vpop.f32.mrb[0].mxu0
    %v414 = vadd.f32 %v285, %v413
    %v415 = vpop.f32.mrb[0].mxu0
    %416 = vmatprep.mubr.f32.mxu0 0.0
    %417 = vmatmul.mubr.f32.gmra.mrb[0].mxu0 %v315
    %v418 = vpop.f32.mrb[0].mxu0
    %v419 = vadd.f32 %v290, %v418
    %v420 = vpop.f32.mrb[0].mxu0
    %421 = vdwg.mxu0
    %v422 = vld [vmem:[%s5] sm:$0xff]
    %v424 = vsel %vm145, %v422, 0
    %426 = vmatprep.subr.mxu0 %v48
    %427 = vmatpush1.msra.mxu0 %v47
    %428 = vmatprep.subr.mxu0 %v50
    %429 = vmatpush1.msra.mxu0 %v49
    %430 = vmatprep.subr.mxu0 %v52
    %431 = vmatpush1.msra.mxu0 %v51
    %432 = vmatprep.subr.mxu0 %v54
    %433 = vmatpush1.msra.mxu0 %v53
    %434 = vmatprep.subr.mxu0 %v56
    %435 = vmatpush1.msra.mxu0 %v55
    %436 = vmatprep.subr.mxu0 %v58
    %437 = vmatpush1.msra.mxu0 %v57
    %438 = vmatprep.subr.mxu0 %v60
    %439 = vmatpush1.msra.mxu0 %v59
    %440 = vmatprep.subr.mxu0 %v62
    %441 = vmatpush1.msra.mxu0 %v61
    %442 = vmatprep.subr.mxu0 0.0
    %443 = vmatpush1.msra.mxu0 0.0
    %444 = vmatprep.subr.mxu0 0.0
    %445 = vmatpush1.msra.mxu0 0.0
    %446 = vmatprep.subr.mxu0 0.0
    %447 = vmatpush1.msra.mxu0 0.0
    %448 = vmatprep.subr.mxu0 0.0
    %449 = vmatpush1.msra.mxu0 0.0
    %450 = vmatprep.subr.mxu0 0.0
    %451 = vmatpush1.msra.mxu0 0.0
    %452 = vmatprep.subr.mxu0 0.0
    %453 = vmatpush1.msra.mxu0 0.0
    %454 = vmatprep.subr.mxu0 0.0
    %455 = vmatpush1.msra.mxu0 0.0
    %456 = vmatprep.subr.mxu0 0.0
    %457 = vmatpush1.msra.mxu0 0.0
    %458 = vmatprep.subr.mxu0 0.0
    %459 = vmatpush1.msra.mxu0 0.0
    %460 = vmatprep.subr.mxu0 0.0
    %461 = vmatpush1.msra.mxu0 0.0
    %462 = vmatprep.subr.mxu0 0.0
    %463 = vmatpush1.msra.mxu0 0.0
    %464 = vmatprep.subr.mxu0 0.0
    %465 = vmatpush1.msra.mxu0 0.0
    %466 = vmatprep.subr.mxu0 0.0
    %467 = vmatpush1.msra.mxu0 0.0
    %468 = vmatprep.subr.mxu0 0.0
    %469 = vmatpush1.msra.mxu0 0.0
    %470 = vmatprep.subr.mxu0 0.0
    %471 = vmatpush1.msra.mxu0 0.0
    %472 = vmatprep.subr.mxu0 0.0
    %473 = vmatpush1.msra.mxu0 0.0
    %474 = vmatprep.subr.mxu0 0.0
    %475 = vmatpush1.msra.mxu0 0.0
    %476 = vmatprep.subr.mxu0 0.0
    %477 = vmatpush1.msra.mxu0 0.0
    %478 = vmatprep.subr.mxu0 0.0
    %479 = vmatpush1.msra.mxu0 0.0
    %480 = vmatprep.subr.mxu0 0.0
    %481 = vmatpush1.msra.mxu0 0.0
    %482 = vmatprep.subr.mxu0 0.0
    %483 = vmatpush1.msra.mxu0 0.0
    %484 = vmatprep.subr.mxu0 0.0
    %485 = vmatpush1.msra.mxu0 0.0
    %486 = vmatprep.subr.mxu0 0.0
    %487 = vmatpush1.msra.mxu0 0.0
    %488 = vmatprep.subr.mxu0 0.0
    %489 = vmatpush1.msra.mxu0 0.0
    %490 = vmatprep.mubr.f32.mxu0 0.0
    %491 = vmatmul.mubr.f32.gmra.mrb[0].mxu0 %v424
    %v492 = vpop.f32.mrb[0].mxu0
    %v493 = vadd.f32 0.0, %v492
    %v494 = vpop.f32.mrb[0].mxu0
    %v495 = vadd.f32 0.0, %v494
    %496 = vdwg.mxu0
    %497 = vmatprep.subr.mxu0 %v64
    %498 = vmatpush1.msra.mxu0 %v63
    %499 = vmatprep.subr.mxu0 %v66
    %500 = vmatpush1.msra.mxu0 %v65
    %501 = vmatprep.subr.mxu0 %v68
    %502 = vmatpush1.msra.mxu0 %v67
    %503 = vmatprep.subr.mxu0 %v70
    %504 = vmatpush1.msra.mxu0 %v69
    %505 = vmatprep.subr.mxu0 %v72
    %506 = vmatpush1.msra.mxu0 %v71
    %507 = vmatprep.subr.mxu0 %v74
    %508 = vmatpush1.msra.mxu0 %v73
    %509 = vmatprep.subr.mxu0 %v76
    %510 = vmatpush1.msra.mxu0 %v75
    %511 = vmatprep.subr.mxu0 %v78
    %512 = vmatpush1.msra.mxu0 %v77
    %513 = vmatprep.subr.mxu0 0.0
    %514 = vmatpush1.msra.mxu0 0.0
    %515 = vmatprep.subr.mxu0 0.0
    %516 = vmatpush1.msra.mxu0 0.0
    %517 = vmatprep.subr.mxu0 0.0
    %518 = vmatpush1.msra.mxu0 0.0
    %519 = vmatprep.subr.mxu0 0.0
    %520 = vmatpush1.msra.mxu0 0.0
    %521 = vmatprep.subr.mxu0 0.0
    %522 = vmatpush1.msra.mxu0 0.0
    %523 = vmatprep.subr.mxu0 0.0
    %524 = vmatpush1.msra.mxu0 0.0
    %525 = vmatprep.subr.mxu0 0.0
    %526 = vmatpush1.msra.mxu0 0.0
    %527 = vmatprep.subr.mxu0 0.0
    %528 = vmatpush1.msra.mxu0 0.0
    %529 = vmatprep.subr.mxu0 0.0
    %530 = vmatpush1.msra.mxu0 0.0
    %531 = vmatprep.subr.mxu0 0.0
    %532 = vmatpush1.msra.mxu0 0.0
    %533 = vmatprep.subr.mxu0 0.0
    %534 = vmatpush1.msra.mxu0 0.0
    %535 = vmatprep.subr.mxu0 0.0
    %536 = vmatpush1.msra.mxu0 0.0
    %537 = vmatprep.subr.mxu0 0.0
    %538 = vmatpush1.msra.mxu0 0.0
    %539 = vmatprep.subr.mxu0 0.0
    %540 = vmatpush1.msra.mxu0 0.0
    %541 = vmatprep.subr.mxu0 0.0
    %542 = vmatpush1.msra.mxu0 0.0
    %543 = vmatprep.subr.mxu0 0.0
    %544 = vmatpush1.msra.mxu0 0.0
    %545 = vmatprep.subr.mxu0 0.0
    %546 = vmatpush1.msra.mxu0 0.0
    %547 = vmatprep.subr.mxu0 0.0
    %548 = vmatpush1.msra.mxu0 0.0
    %549 = vmatprep.subr.mxu0 0.0
    %550 = vmatpush1.msra.mxu0 0.0
    %551 = vmatprep.subr.mxu0 0.0
    %552 = vmatpush1.msra.mxu0 0.0
    %553 = vmatprep.subr.mxu0 0.0
    %554 = vmatpush1.msra.mxu0 0.0
    %555 = vmatprep.subr.mxu0 0.0
    %556 = vmatpush1.msra.mxu0 0.0
    %557 = vmatprep.subr.mxu0 0.0
    %558 = vmatpush1.msra.mxu0 0.0
    %559 = vmatprep.subr.mxu0 0.0
    %560 = vmatpush1.msra.mxu0 0.0
    %561 = vmatprep.mubr.f32.mxu0 0.0
    %562 = vmatmul.mubr.f32.gmra.mrb[0].mxu0 %v424
    %v563 = vpop.f32.mrb[0].mxu0
    %v564 = vadd.f32 0.0, %v563
    %v565 = vpop.f32.mrb[0].mxu0
    %v566 = vadd.f32 0.0, %v565
    %567 = vdwg.mxu0
    %v568 = vadd.f32 %v493, %v495
    %v569 = vadd.f32 %v568, %v564
    %v570 = vadd.f32 %v569, %v566
    %571 = vadd.xlane.f32.xlu0 %v570
    %v572 = vpop.xlane.xlu0 %571
    %v573 = vmul.f32 %v493, %v493
    %v574 = vmul.f32 %v495, %v495
    %v575 = vmul.f32 %v564, %v564
    %v576 = vmul.f32 %v566, %v566
    %v577 = vadd.f32 %v573, %v574
    %v578 = vadd.f32 %v577, %v575
    %v579 = vadd.f32 %v578, %v576
    %580 = vadd.xlane.f32.xlu0 %v579
    %v581 = vpop.xlane.xlu0 %580
    %v582 = vmul.f32 %v572, 0.001953125
    %v583 = vmul.f32 %v581, 0.001953125
    %v584 = vmul.f32 %v582, %v582
    %v585 = vsub.f32 %v583, %v584
    %v586 = vsub.f32 %v493, %v582
    %v587 = vsub.f32 %v495, %v582
    %v588 = vsub.f32 %v564, %v582
    %v589 = vsub.f32 %v566, %v582
    %v590 = vadd.f32 %v585, 1e-05
    %v591 = vrsqrt.pop %v590
    %v592 = vmul.f32 %v586, %v591
    %v593 = vmul.f32 %v587, %v591
    %v594 = vmul.f32 %v588, %v591
    %v595 = vmul.f32 %v589, %v591
    %v596 = vmax.f32 %v592, 0.0
    %v597 = vmax.f32 %v593, 0.0
    %v598 = vmax.f32 %v594, 0.0
    %v599 = vmax.f32 %v595, 0.0
    %v600 = vld [vmem:[%s1] sm:$0xff]
    %v601 = vld [vmem:[%s1 + $0x8] sm:$0xff]
    %v602 = vld [vmem:[%s1 + $0x10] sm:$0xff]
    %v603 = vld [vmem:[%s1 + $0x18] sm:$0xff]
    %v604 = vld [vmem:[%s1 + $0x20] sm:$0x1]
    %v605 = vld [vmem:[%s1 + $0x28] sm:$0x1]
    %v606 = vld [vmem:[%s1 + $0x30] sm:$0x1]
    %v607 = vld [vmem:[%s1 + $0x38] sm:$0x1]
    %608 = vrot.lane.b32.xlu0 %v596, 68
    %v609 = vpop.permute.xlu0 %608
    %610 = vrot.lane.b32.xlu0 %v597, 68
    %v611 = vpop.permute.xlu0 %610
    %612 = vrot.lane.b32.xlu0 %v598, 68
    %v613 = vpop.permute.xlu0 %612
    %614 = vrot.lane.b32.xlu0 %v599, 68
    %v615 = vpop.permute.xlu0 %614
    %v616 = vlaneseq
    %v617 = vand.u32 %v616, 127
    %vm618 = vcmp.lt.s32.totalorder %v617, 68
    %v619 = vsel %vm618, %v613, %v615
    %v620 = vsel %vm618, %v611, %v613
    %v621 = vsel %vm618, %v609, %v611
    %v622 = vsel %vm618, %v615, %v609
    %v623 = vlaneseq
    %v624 = vshrl.u32 %v623, 7
    %v625 = vsub.s32 0, %v624
    %v626 = vrot.slane %v600, %v625
    %v627 = vlaneseq
    %v628 = vshrl.u32 %v627, 7
    %v629 = vsub.s32 0, %v628
    %v630 = vrot.slane %v601, %v629
    %v631 = vlaneseq
    %v632 = vshrl.u32 %v631, 7
    %v633 = vsub.s32 0, %v632
    %v634 = vrot.slane %v602, %v633
    %v635 = vlaneseq
    %v636 = vshrl.u32 %v635, 7
    %v637 = vsub.s32 0, %v636
    %v638 = vrot.slane %v603, %v637
    %v639 = vmul.f32 %v622, %v626
    %v640 = vmul.f32 %v621, %v630
    %v641 = vmul.f32 %v620, %v634
    %v642 = vmul.f32 %v619, %v638
    %643 = vst [vmem:[#allocation2] sm:$0xff] %v639
    %644 = vst [vmem:[#allocation2 + $0x8] sm:$0xff] %v640
    %645 = vst [vmem:[#allocation2 + $0x10] sm:$0xff] %v641
    %646 = vst [vmem:[#allocation2 + $0x18] sm:$0xff] %v642
    %647 = vrot.lane.b32.xlu0 %v596, 64
    %v648 = vpop.permute.xlu0 %647
    %649 = vrot.lane.b32.xlu0 %v597, 64
    %v650 = vpop.permute.xlu0 %649
    %651 = vrot.lane.b32.xlu0 %v598, 64
    %v652 = vpop.permute.xlu0 %651
    %653 = vrot.lane.b32.xlu0 %v599, 64
    %v654 = vpop.permute.xlu0 %653
    %vm655 = vcmp.lt.s32.totalorder %v617, 64
    %v656 = vsel %vm655, %v652, %v654
    %v657 = vsel %vm655, %v650, %v652
    %v658 = vsel %vm655, %v648, %v650
    %v659 = vsel %vm655, %v654, %v648
    %v660 = vlaneseq
    %v661 = vshrl.u32 %v660, 7
    %v662 = vsub.s32 1, %v661
    %v663 = vrot.slane %v600, %v662
    %v664 = vlaneseq
    %v665 = vshrl.u32 %v664, 7
    %v666 = vsub.s32 1, %v665
    %v667 = vrot.slane %v601, %v666
    %v668 = vlaneseq
    %v669 = vshrl.u32 %v668, 7
    %v670 = vsub.s32 1, %v669
    %v671 = vrot.slane %v602, %v670
    %v672 = vlaneseq
    %v673 = vshrl.u32 %v672, 7
    %v674 = vsub.s32 1, %v673
    %v675 = vrot.slane %v603, %v674
    %v676 = vmul.f32 %v659, %v663
    %v677 = vmul.f32 %v658, %v667
    %v678 = vmul.f32 %v657, %v671
    %v679 = vmul.f32 %v656, %v675
    %680 = vst [vmem:[#allocation2 + $0x20] sm:$0xff] %v676
    %681 = vst [vmem:[#allocation2 + $0x28] sm:$0xff] %v677
    %682 = vst [vmem:[#allocation2 + $0x30] sm:$0xff] %v678
    %683 = vst [vmem:[#allocation2 + $0x38] sm:$0xff] %v679
    %684 = vrot.lane.b32.xlu0 %v596, 60
    %v685 = vpop.permute.xlu0 %684
    %686 = vrot.lane.b32.xlu0 %v597, 60
    %v687 = vpop.permute.xlu0 %686
    %688 = vrot.lane.b32.xlu0 %v598, 60
    %v689 = vpop.permute.xlu0 %688
    %690 = vrot.lane.b32.xlu0 %v599, 60
    %v691 = vpop.permute.xlu0 %690
    %vm692 = vcmp.lt.s32.totalorder %v617, 60
    %v693 = vsel %vm692, %v689, %v691
    %v694 = vsel %vm692, %v687, %v689
    %v695 = vsel %vm692, %v685, %v687
    %v696 = vsel %vm692, %v691, %v685
    %v697 = vlaneseq
    %v698 = vshrl.u32 %v697, 7
    %v699 = vsub.s32 2, %v698
    %v700 = vrot.slane %v600, %v699
    %v701 = vlaneseq
    %v702 = vshrl.u32 %v701, 7
    %v703 = vsub.s32 2, %v702
    %v704 = vrot.slane %v601, %v703
    %v705 = vlaneseq
    %v706 = vshrl.u32 %v705, 7
    %v707 = vsub.s32 2, %v706
    %v708 = vrot.slane %v602, %v707
    %v709 = vlaneseq
    %v710 = vshrl.u32 %v709, 7
    %v711 = vsub.s32 2, %v710
    %v712 = vrot.slane %v603, %v711
    %v713 = vmul.f32 %v696, %v700
    %v714 = vmul.f32 %v695, %v704
    %v715 = vmul.f32 %v694, %v708
    %v716 = vmul.f32 %v693, %v712
    %717 = vst [vmem:[#allocation2 + $0x40] sm:$0xff] %v713
    %718 = vst [vmem:[#allocation2 + $0x48] sm:$0xff] %v714
    %719 = vst [vmem:[#allocation2 + $0x50] sm:$0xff] %v715
    %720 = vst [vmem:[#allocation2 + $0x58] sm:$0xff] %v716
    %721 = vrot.lane.b32.xlu0 %v596, 4
    %v722 = vpop.permute.xlu0 %721
    %723 = vrot.lane.b32.xlu0 %v597, 4
    %v724 = vpop.permute.xlu0 %723
    %725 = vrot.lane.b32.xlu0 %v598, 4
    %v726 = vpop.permute.xlu0 %725
    %727 = vrot.lane.b32.xlu0 %v599, 4
    %v728 = vpop.permute.xlu0 %727
    %vm729 = vcmp.lt.s32.totalorder %v617, 4
    %v730 = vsel %vm729, %v726, %v728
    %v731 = vsel %vm729, %v724, %v726
    %v732 = vsel %vm729, %v722, %v724
    %v733 = vsel %vm729, %v728, %v722
    %v734 = vlaneseq
    %v735 = vshrl.u32 %v734, 7
    %v736 = vsub.s32 3, %v735
    %v737 = vrot.slane %v600, %v736
    %v738 = vlaneseq
    %v739 = vshrl.u32 %v738, 7
    %v740 = vsub.s32 3, %v739
    %v741 = vrot.slane %v601, %v740
    %v742 = vlaneseq
    %v743 = vshrl.u32 %v742, 7
    %v744 = vsub.s32 3, %v743
    %v745 = vrot.slane %v602, %v744
    %v746 = vlaneseq
    %v747 = vshrl.u32 %v746, 7
    %v748 = vsub.s32 3, %v747
    %v749 = vrot.slane %v603, %v748
    %v750 = vmul.f32 %v733, %v737
    %v751 = vmul.f32 %v732, %v741
    %v752 = vmul.f32 %v731, %v745
    %v753 = vmul.f32 %v730, %v749
    %754 = vst [vmem:[#allocation2 + $0x60] sm:$0xff] %v750
    %755 = vst [vmem:[#allocation2 + $0x68] sm:$0xff] %v751
    %756 = vst [vmem:[#allocation2 + $0x70] sm:$0xff] %v752
    %757 = vst [vmem:[#allocation2 + $0x78] sm:$0xff] %v753
    %758 = vst [vmem:[#allocation2 + $0x80] sm:$0xff] %v596
    %759 = vst [vmem:[#allocation2 + $0x88] sm:$0xff] %v597
    %760 = vst [vmem:[#allocation2 + $0x90] sm:$0xff] %v598
    %761 = vst [vmem:[#allocation2 + $0x98] sm:$0xff] %v599
    %762 = vrot.lane.b32.xlu0 %v596, 124
    %v763 = vpop.permute.xlu0 %762
    %764 = vrot.lane.b32.xlu0 %v597, 124
    %v765 = vpop.permute.xlu0 %764
    %766 = vrot.lane.b32.xlu0 %v598, 124
    %v767 = vpop.permute.xlu0 %766
    %768 = vrot.lane.b32.xlu0 %v599, 124
    %v769 = vpop.permute.xlu0 %768
    %vm770 = vcmp.lt.s32.totalorder %v617, 124
    %v771 = vsel %vm770, %v767, %v769
    %v772 = vsel %vm770, %v765, %v767
    %v773 = vsel %vm770, %v763, %v765
    %v774 = vsel %vm770, %v769, %v763
    %v775 = vlaneseq
    %v776 = vshrl.u32 %v775, 7
    %v777 = vsub.s32 5, %v776
    %v778 = vrot.slane %v600, %v777
    %v779 = vlaneseq
    %v780 = vshrl.u32 %v779, 7
    %v781 = vsub.s32 5, %v780
    %v782 = vrot.slane %v601, %v781
    %v783 = vlaneseq
    %v784 = vshrl.u32 %v783, 7
    %v785 = vsub.s32 5, %v784
    %v786 = vrot.slane %v602, %v785
    %v787 = vlaneseq
    %v788 = vshrl.u32 %v787, 7
    %v789 = vsub.s32 5, %v788
    %v790 = vrot.slane %v603, %v789
    %v791 = vmul.f32 %v773, %v778
    %v792 = vmul.f32 %v772, %v782
    %v793 = vmul.f32 %v771, %v786
    %v794 = vmul.f32 %v774, %v790
    %795 = vst [vmem:[#allocation2 + $0xa0] sm:$0xff] %v791
    %796 = vst [vmem:[#allocation2 + $0xa8] sm:$0xff] %v792
    %797 = vst [vmem:[#allocation2 + $0xb0] sm:$0xff] %v793
    %798 = vst [vmem:[#allocation2 + $0xb8] sm:$0xff] %v794
    %v799 = vlaneseq
    %v800 = vshrl.u32 %v799, 7
    %v801 = vsub.s32 6, %v800
    %v802 = vrot.slane %v600, %v801
    %v803 = vlaneseq
    %v804 = vshrl.u32 %v803, 7
    %v805 = vsub.s32 6, %v804
    %v806 = vrot.slane %v601, %v805
    %v807 = vlaneseq
    %v808 = vshrl.u32 %v807, 7
    %v809 = vsub.s32 6, %v808
    %v810 = vrot.slane %v602, %v809
    %v811 = vlaneseq
    %v812 = vshrl.u32 %v811, 7
    %v813 = vsub.s32 6, %v812
    %v814 = vrot.slane %v603, %v813
    %v815 = vmul.f32 %v621, %v802
    %v816 = vmul.f32 %v620, %v806
    %v817 = vmul.f32 %v619, %v810
    %v818 = vmul.f32 %v622, %v814
    %819 = vst [vmem:[#allocation2 + $0xc0] sm:$0xff] %v815
    %820 = vst [vmem:[#allocation2 + $0xc8] sm:$0xff] %v816
    %821 = vst [vmem:[#allocation2 + $0xd0] sm:$0xff] %v817
    %822 = vst [vmem:[#allocation2 + $0xd8] sm:$0xff] %v818
    %v823 = vlaneseq
    %v824 = vshrl.u32 %v823, 7
    %v825 = vsub.s32 7, %v824
    %v826 = vrot.slane %v600, %v825
    %v827 = vlaneseq
    %v828 = vshrl.u32 %v827, 7
    %v829 = vsub.s32 7, %v828
    %v830 = vrot.slane %v601, %v829
    %v831 = vlaneseq
    %v832 = vshrl.u32 %v831, 7
    %v833 = vsub.s32 7, %v832
    %v834 = vrot.slane %v602, %v833
    %v835 = vlaneseq
    %v836 = vshrl.u32 %v835, 7
    %v837 = vsub.s32 7, %v836
    %v838 = vrot.slane %v603, %v837
    %v839 = vmul.f32 %v658, %v826
    %v840 = vmul.f32 %v657, %v830
    %v841 = vmul.f32 %v656, %v834
    %v842 = vmul.f32 %v659, %v838
    %843 = vst [vmem:[#allocation2 + $0xe0] sm:$0xff] %v839
    %844 = vst [vmem:[#allocation2 + $0xe8] sm:$0xff] %v840
    %845 = vst [vmem:[#allocation2 + $0xf0] sm:$0xff] %v841
    %846 = vst [vmem:[#allocation2 + $0xf8] sm:$0xff] %v842
    %v847 = vlaneseq
    %v848 = vshrl.u32 %v847, 7
    %v849 = vsub.s32 0, %v848
    %v850 = vrot.slane %v604, %v849
    %v851 = vlaneseq
    %v852 = vshrl.u32 %v851, 7
    %v853 = vsub.s32 0, %v852
    %v854 = vrot.slane %v605, %v853
    %v855 = vlaneseq
    %v856 = vshrl.u32 %v855, 7
    %v857 = vsub.s32 0, %v856
    %v858 = vrot.slane %v606, %v857
    %v859 = vlaneseq
    %v860 = vshrl.u32 %v859, 7
    %v861 = vsub.s32 0, %v860
    %v862 = vrot.slane %v607, %v861
    %v863 = vmul.f32 %v695, %v850
    %v864 = vmul.f32 %v694, %v854
    %v865 = vmul.f32 %v693, %v858
    %v866 = vmul.f32 %v696, %v862
    %867 = vst [vmem:[#allocation2 + $0x100] sm:$0xff] %v863
    %868 = vst [vmem:[#allocation2 + $0x108] sm:$0xff] %v864
    %869 = vst [vmem:[#allocation2 + $0x110] sm:$0xff] %v865
    %870 = vst [vmem:[#allocation2 + $0x118] sm:$0xff] %v866
    %v871 = vld [vmem:[%s6] sm:$0xff]
    %v872 = vld [vmem:[#allocation2] sm:$0xff]
    %v873 = vld [vmem:[#allocation2 + $0x8] sm:$0xff]
    %v874 = vld [vmem:[#allocation2 + $0x10] sm:$0xff]
    %v875 = vld [vmem:[#allocation2 + $0x18] sm:$0xff]
    %v876 = vld [vmem:[#allocation2 + $0x20] sm:$0xff]
    %v877 = vld [vmem:[#allocation2 + $0x28] sm:$0xff]
    %v878 = vld [vmem:[#allocation2 + $0x30] sm:$0xff]
    %v879 = vld [vmem:[#allocation2 + $0x38] sm:$0xff]
    %v880 = vld [vmem:[#allocation2 + $0x40] sm:$0xff]
    %v881 = vld [vmem:[#allocation2 + $0x48] sm:$0xff]
    %v882 = vld [vmem:[#allocation2 + $0x50] sm:$0xff]
    %v883 = vld [vmem:[#allocation2 + $0x58] sm:$0xff]
    %v884 = vld [vmem:[#allocation2 + $0x60] sm:$0xff]
    %v885 = vld [vmem:[#allocation2 + $0x68] sm:$0xff]
    %v886 = vld [vmem:[#allocation2 + $0x70] sm:$0xff]
    %v887 = vld [vmem:[#allocation2 + $0x78] sm:$0xff]
    %v888 = vld [vmem:[#allocation2 + $0x80] sm:$0xff]
    %v889 = vld [vmem:[#allocation2 + $0x88] sm:$0xff]
    %v890 = vld [vmem:[#allocation2 + $0x90] sm:$0xff]
    %v891 = vld [vmem:[#allocation2 + $0x98] sm:$0xff]
    %v892 = vld [vmem:[#allocation2 + $0xa0] sm:$0xff]
    %v893 = vld [vmem:[#allocation2 + $0xa8] sm:$0xff]
    %v894 = vld [vmem:[#allocation2 + $0xb0] sm:$0xff]
    %v895 = vld [vmem:[#allocation2 + $0xb8] sm:$0xff]
    %v896 = vld [vmem:[#allocation2 + $0xc0] sm:$0xff]
    %v897 = vld [vmem:[#allocation2 + $0xc8] sm:$0xff]
    %v898 = vld [vmem:[#allocation2 + $0xd0] sm:$0xff]
    %v899 = vld [vmem:[#allocation2 + $0xd8] sm:$0xff]
    %v900 = vld [vmem:[#allocation2 + $0xe0] sm:$0xff]
    %v901 = vld [vmem:[#allocation2 + $0xe8] sm:$0xff]
    %v902 = vld [vmem:[#allocation2 + $0xf0] sm:$0xff]
    %v903 = vld [vmem:[#allocation2 + $0xf8] sm:$0xff]
    %v904 = vld [vmem:[#allocation2 + $0x100] sm:$0xff]
    %v905 = vld [vmem:[#allocation2 + $0x108] sm:$0xff]
    %v906 = vld [vmem:[#allocation2 + $0x110] sm:$0xff]
    %v907 = vld [vmem:[#allocation2 + $0x118] sm:$0xff]
    %vm908 = vcmask 588800
    %v910 = vsel %vm908, %v871, 0
    %912 = vmatprep.subr.mxu0 %v873
    %913 = vmatpush1.msra.mxu0 %v872
    %914 = vmatprep.subr.mxu0 %v877
    %915 = vmatpush1.msra.mxu0 %v876
    %916 = vmatprep.subr.mxu0 %v881
    %917 = vmatpush1.msra.mxu0 %v880
    %918 = vmatprep.subr.mxu0 %v885
    %919 = vmatpush1.msra.mxu0 %v884
    %920 = vmatprep.subr.mxu0 %v889
    %921 = vmatpush1.msra.mxu0 %v888
    %922 = vmatprep.subr.mxu0 %v893
    %923 = vmatpush1.msra.mxu0 %v892
    %924 = vmatprep.subr.mxu0 %v897
    %925 = vmatpush1.msra.mxu0 %v896
    %926 = vmatprep.subr.mxu0 %v901
    %927 = vmatpush1.msra.mxu0 %v900
    %928 = vmatprep.subr.mxu0 %v905
    %929 = vmatpush1.msra.mxu0 %v904
    %930 = vmatprep.subr.mxu0 0.0
    %931 = vmatpush1.msra.mxu0 0.0
    %932 = vmatprep.subr.mxu0 0.0
    %933 = vmatpush1.msra.mxu0 0.0
    %934 = vmatprep.subr.mxu0 0.0
    %935 = vmatpush1.msra.mxu0 0.0
    %936 = vmatprep.subr.mxu0 0.0
    %937 = vmatpush1.msra.mxu0 0.0
    %938 = vmatprep.subr.mxu0 0.0
    %939 = vmatpush1.msra.mxu0 0.0
    %940 = vmatprep.subr.mxu0 0.0
    %941 = vmatpush1.msra.mxu0 0.0
    %942 = vmatprep.subr.mxu0 0.0
    %943 = vmatpush1.msra.mxu0 0.0
    %944 = vmatprep.subr.mxu0 0.0
    %945 = vmatpush1.msra.mxu0 0.0
    %946 = vmatprep.subr.mxu0 0.0
    %947 = vmatpush1.msra.mxu0 0.0
    %948 = vmatprep.subr.mxu0 0.0
    %949 = vmatpush1.msra.mxu0 0.0
    %950 = vmatprep.subr.mxu0 0.0
    %951 = vmatpush1.msra.mxu0 0.0
    %952 = vmatprep.subr.mxu0 0.0
    %953 = vmatpush1.msra.mxu0 0.0
    %954 = vmatprep.subr.mxu0 0.0
    %955 = vmatpush1.msra.mxu0 0.0
    %956 = vmatprep.subr.mxu0 0.0
    %957 = vmatpush1.msra.mxu0 0.0
    %958 = vmatprep.subr.mxu0 0.0
    %959 = vmatpush1.msra.mxu0 0.0
    %960 = vmatprep.subr.mxu0 0.0
    %961 = vmatpush1.msra.mxu0 0.0
    %962 = vmatprep.subr.mxu0 0.0
    %963 = vmatpush1.msra.mxu0 0.0
    %964 = vmatprep.subr.mxu0 0.0
    %965 = vmatpush1.msra.mxu0 0.0
    %966 = vmatprep.subr.mxu0 0.0
    %967 = vmatpush1.msra.mxu0 0.0
    %968 = vmatprep.subr.mxu0 0.0
    %969 = vmatpush1.msra.mxu0 0.0
    %970 = vmatprep.subr.mxu0 0.0
    %971 = vmatpush1.msra.mxu0 0.0
    %972 = vmatprep.subr.mxu0 0.0
    %973 = vmatpush1.msra.mxu0 0.0
    %974 = vmatprep.subr.mxu0 0.0
    %975 = vmatpush1.msra.mxu0 0.0
    %976 = vmatprep.mubr.f32.mxu0 0.0
    %977 = vmatmul.mubr.f32.gmra.mrb[0].mxu0 %v910
    %v978 = vpop.f32.mrb[0].mxu0
    %v979 = vadd.f32 0.0, %v978
    %v980 = vpop.f32.mrb[0].mxu0
    %v981 = vadd.f32 0.0, %v980
    %982 = vdwg.mxu0
    %983 = vmatprep.subr.mxu0 %v875
    %984 = vmatpush1.msra.mxu0 %v874
    %985 = vmatprep.subr.mxu0 %v879
    %986 = vmatpush1.msra.mxu0 %v878
    %987 = vmatprep.subr.mxu0 %v883
    %988 = vmatpush1.msra.mxu0 %v882
    %989 = vmatprep.subr.mxu0 %v887
    %990 = vmatpush1.msra.mxu0 %v886
    %991 = vmatprep.subr.mxu0 %v891
    %992 = vmatpush1.msra.mxu0 %v890
    %993 = vmatprep.subr.mxu0 %v895
    %994 = vmatpush1.msra.mxu0 %v894
    %995 = vmatprep.subr.mxu0 %v899
    %996 = vmatpush1.msra.mxu0 %v898
    %997 = vmatprep.subr.mxu0 %v903
    %998 = vmatpush1.msra.mxu0 %v902
    %999 = vmatprep.subr.mxu0 %v907
    %1000 = vmatpush1.msra.mxu0 %v906
    %1001 = vmatprep.subr.mxu0 0.0
    %1002 = vmatpush1.msra.mxu0 0.0
    %1003 = vmatprep.subr.mxu0 0.0
    %1004 = vmatpush1.msra.mxu0 0.0
    %1005 = vmatprep.subr.mxu0 0.0
    %1006 = vmatpush1.msra.mxu0 0.0
    %1007 = vmatprep.subr.mxu0 0.0
    %1008 = vmatpush1.msra.mxu0 0.0
    %1009 = vmatprep.subr.mxu0 0.0
    %1010 = vmatpush1.msra.mxu0 0.0
    %1011 = vmatprep.subr.mxu0 0.0
    %1012 = vmatpush1.msra.mxu0 0.0
    %1013 = vmatprep.subr.mxu0 0.0
    %1014 = vmatpush1.msra.mxu0 0.0
    %1015 = vmatprep.subr.mxu0 0.0
    %1016 = vmatpush1.msra.mxu0 0.0
    %1017 = vmatprep.subr.mxu0 0.0
    %1018 = vmatpush1.msra.mxu0 0.0
    %1019 = vmatprep.subr.mxu0 0.0
    %1020 = vmatpush1.msra.mxu0 0.0
    %1021 = vmatprep.subr.mxu0 0.0
    %1022 = vmatpush1.msra.mxu0 0.0
    %1023 = vmatprep.subr.mxu0 0.0
    %1024 = vmatpush1.msra.mxu0 0.0
    %1025 = vmatprep.subr.mxu0 0.0
    %1026 = vmatpush1.msra.mxu0 0.0
    %1027 = vmatprep.subr.mxu0 0.0
    %1028 = vmatpush1.msra.mxu0 0.0
    %1029 = vmatprep.subr.mxu0 0.0
    %1030 = vmatpush1.msra.mxu0 0.0
    %1031 = vmatprep.subr.mxu0 0.0
    %1032 = vmatpush1.msra.mxu0 0.0
    %1033 = vmatprep.subr.mxu0 0.0
    %1034 = vmatpush1.msra.mxu0 0.0
    %1035 = vmatprep.subr.mxu0 0.0
    %1036 = vmatpush1.msra.mxu0 0.0
    %1037 = vmatprep.subr.mxu0 0.0
    %1038 = vmatpush1.msra.mxu0 0.0
    %1039 = vmatprep.subr.mxu0 0.0
    %1040 = vmatpush1.msra.mxu0 0.0
    %1041 = vmatprep.subr.mxu0 0.0
    %1042 = vmatpush1.msra.mxu0 0.0
    %1043 = vmatprep.subr.mxu0 0.0
    %1044 = vmatpush1.msra.mxu0 0.0
    %1045 = vmatprep.subr.mxu0 0.0
    %1046 = vmatpush1.msra.mxu0 0.0
    %1047 = vmatprep.mubr.f32.mxu0 0.0
    %1048 = vmatmul.mubr.f32.gmra.mrb[0].mxu0 %v910
    %v1049 = vpop.f32.mrb[0].mxu0
    %v1050 = vadd.f32 0.0, %v1049
    %v1051 = vpop.f32.mrb[0].mxu0
    %v1052 = vadd.f32 0.0, %v1051
    %1053 = vdwg.mxu0
    %v1054 = vadd.f32 %v979, %v981
    %v1055 = vadd.f32 %v1054, %v1050
    %v1056 = vadd.f32 %v1055, %v1052
    %1057 = vadd.xlane.f32.xlu0 %v1056
    %v1058 = vpop.xlane.xlu0 %1057
    %v1059 = vmul.f32 %v979, %v979
    %v1060 = vmul.f32 %v981, %v981
    %v1061 = vmul.f32 %v1050, %v1050
    %v1062 = vmul.f32 %v1052, %v1052
    %v1063 = vadd.f32 %v1059, %v1060
    %v1064 = vadd.f32 %v1063, %v1061
    %v1065 = vadd.f32 %v1064, %v1062
    %1066 = vadd.xlane.f32.xlu0 %v1065
    %v1067 = vpop.xlane.xlu0 %1066
    %v1068 = vmul.f32 %v1058, 0.001953125
    %v1069 = vmul.f32 %v1067, 0.001953125
    %v1070 = vmul.f32 %v1068, %v1068
    %v1071 = vsub.f32 %v1069, %v1070
    %v1072 = vsub.f32 %v979, %v1068
    %v1073 = vsub.f32 %v981, %v1068
    %v1074 = vsub.f32 %v1050, %v1068
    %v1075 = vsub.f32 %v1052, %v1068
    %v1076 = vadd.f32 %v1071, 1e-05
    %v1077 = vrsqrt.pop %v1076
    %v1078 = vmul.f32 %v1072, %v1077
    %v1079 = vmul.f32 %v1073, %v1077
    %v1080 = vmul.f32 %v1074, %v1077
    %v1081 = vmul.f32 %v1075, %v1077
    %v1082 = vmax.f32 %v1078, 0.0
    %v1083 = vmax.f32 %v1079, 0.0
    %v1084 = vmax.f32 %v1080, 0.0
    %v1085 = vmax.f32 %v1081, 0.0
    %1086 = vrot.lane.b32.xlu0 %v1082, 68
    %v1087 = vpop.permute.xlu0 %1086
    %1088 = vrot.lane.b32.xlu0 %v1083, 68
    %v1089 = vpop.permute.xlu0 %1088
    %1090 = vrot.lane.b32.xlu0 %v1084, 68
    %v1091 = vpop.permute.xlu0 %1090
    %1092 = vrot.lane.b32.xlu0 %v1085, 68
    %v1093 = vpop.permute.xlu0 %1092
    %v1094 = vsel %vm618, %v1091, %v1093
    %v1095 = vsel %vm618, %v1089, %v1091
    %v1096 = vsel %vm618, %v1087, %v1089
    %v1097 = vsel %vm618, %v1093, %v1087
    %v1098 = vmul.f32 %v1097, %v626
    %v1099 = vmul.f32 %v1096, %v630
    %v1100 = vmul.f32 %v1095, %v634
    %v1101 = vmul.f32 %v1094, %v638
    %1102 = vst [vmem:[#allocation2] sm:$0xff] %v1098
    %1103 = vst [vmem:[#allocation2 + $0x8] sm:$0xff] %v1099
    %1104 = vst [vmem:[#allocation2 + $0x10] sm:$0xff] %v1100
    %1105 = vst [vmem:[#allocation2 + $0x18] sm:$0xff] %v1101
    %1106 = vrot.lane.b32.xlu0 %v1082, 64
    %v1107 = vpop.permute.xlu0 %1106
    %1108 = vrot.lane.b32.xlu0 %v1083, 64
    %v1109 = vpop.permute.xlu0 %1108
    %1110 = vrot.lane.b32.xlu0 %v1084, 64
    %v1111 = vpop.permute.xlu0 %1110
    %1112 = vrot.lane.b32.xlu0 %v1085, 64
    %v1113 = vpop.permute.xlu0 %1112
    %v1114 = vsel %vm655, %v1111, %v1113
    %v1115 = vsel %vm655, %v1109, %v1111
    %v1116 = vsel %vm655, %v1107, %v1109
    %v1117 = vsel %vm655, %v1113, %v1107
    %v1118 = vmul.f32 %v1117, %v663
    %v1119 = vmul.f32 %v1116, %v667
    %v1120 = vmul.f32 %v1115, %v671
    %v1121 = vmul.f32 %v1114, %v675
    %1122 = vst [vmem:[#allocation2 + $0x20] sm:$0xff] %v1118
    %1123 = vst [vmem:[#allocation2 + $0x28] sm:$0xff] %v1119
    %1124 = vst [vmem:[#allocation2 + $0x30] sm:$0xff] %v1120
    %1125 = vst [vmem:[#allocation2 + $0x38] sm:$0xff] %v1121
    %1126 = vrot.lane.b32.xlu0 %v1082, 60
    %v1127 = vpop.permute.xlu0 %1126
    %1128 = vrot.lane.b32.xlu0 %v1083, 60
    %v1129 = vpop.permute.xlu0 %1128
    %1130 = vrot.lane.b32.xlu0 %v1084, 60
    %v1131 = vpop.permute.xlu0 %1130
    %1132 = vrot.lane.b32.xlu0 %v1085, 60
    %v1133 = vpop.permute.xlu0 %1132
    %v1134 = vsel %vm692, %v1131, %v1133
    %v1135 = vsel %vm692, %v1129, %v1131
    %v1136 = vsel %vm692, %v1127, %v1129
    %v1137 = vsel %vm692, %v1133, %v1127
    %v1138 = vmul.f32 %v1137, %v700
    %v1139 = vmul.f32 %v1136, %v704
    %v1140 = vmul.f32 %v1135, %v708
    %v1141 = vmul.f32 %v1134, %v712
    %1142 = vst [vmem:[#allocation2 + $0x40] sm:$0xff] %v1138
    %1143 = vst [vmem:[#allocation2 + $0x48] sm:$0xff] %v1139
    %1144 = vst [vmem:[#allocation2 + $0x50] sm:$0xff] %v1140
    %1145 = vst [vmem:[#allocation2 + $0x58] sm:$0xff] %v1141
    %1146 = vrot.lane.b32.xlu0 %v1082, 4
    %v1147 = vpop.permute.xlu0 %1146
    %1148 = vrot.lane.b32.xlu0 %v1083, 4
    %v1149 = vpop.permute.xlu0 %1148
    %1150 = vrot.lane.b32.xlu0 %v1084, 4
    %v1151 = vpop.permute.xlu0 %1150
    %1152 = vrot.lane.b32.xlu0 %v1085, 4
    %v1153 = vpop.permute.xlu0 %1152
    %v1154 = vsel %vm729, %v1151, %v1153
    %v1155 = vsel %vm729, %v1149, %v1151
    %v1156 = vsel %vm729, %v1147, %v1149
    %v1157 = vsel %vm729, %v1153, %v1147
    %v1158 = vmul.f32 %v1157, %v737
    %v1159 = vmul.f32 %v1156, %v741
    %v1160 = vmul.f32 %v1155, %v745
    %v1161 = vmul.f32 %v1154, %v749
    %1162 = vst [vmem:[#allocation2 + $0x60] sm:$0xff] %v1158
    %1163 = vst [vmem:[#allocation2 + $0x68] sm:$0xff] %v1159
    %1164 = vst [vmem:[#allocation2 + $0x70] sm:$0xff] %v1160
    %1165 = vst [vmem:[#allocation2 + $0x78] sm:$0xff] %v1161
    %1166 = vst [vmem:[#allocation2 + $0x80] sm:$0xff] %v1082
    %1167 = vst [vmem:[#allocation2 + $0x88] sm:$0xff] %v1083
    %1168 = vst [vmem:[#allocation2 + $0x90] sm:$0xff] %v1084
    %1169 = vst [vmem:[#allocation2 + $0x98] sm:$0xff] %v1085
    %1170 = vrot.lane.b32.xlu0 %v1082, 124
    %v1171 = vpop.permute.xlu0 %1170
    %1172 = vrot.lane.b32.xlu0 %v1083, 124
    %v1173 = vpop.permute.xlu0 %1172
    %1174 = vrot.lane.b32.xlu0 %v1084, 124
    %v1175 = vpop.permute.xlu0 %1174
    %1176 = vrot.lane.b32.xlu0 %v1085, 124
    %v1177 = vpop.permute.xlu0 %1176
    %v1178 = vsel %vm770, %v1175, %v1177
    %v1179 = vsel %vm770, %v1173, %v1175
    %v1180 = vsel %vm770, %v1171, %v1173
    %v1181 = vsel %vm770, %v1177, %v1171
    %v1182 = vmul.f32 %v1180, %v778
    %v1183 = vmul.f32 %v1179, %v782
    %v1184 = vmul.f32 %v1178, %v786
    %v1185 = vmul.f32 %v1181, %v790
    %1186 = vst [vmem:[#allocation2 + $0xa0] sm:$0xff] %v1182
    %1187 = vst [vmem:[#allocation2 + $0xa8] sm:$0xff] %v1183
    %1188 = vst [vmem:[#allocation2 + $0xb0] sm:$0xff] %v1184
    %1189 = vst [vmem:[#allocation2 + $0xb8] sm:$0xff] %v1185
    %v1190 = vmul.f32 %v1096, %v802
    %v1191 = vmul.f32 %v1095, %v806
    %v1192 = vmul.f32 %v1094, %v810
    %v1193 = vmul.f32 %v1097, %v814
    %1194 = vst [vmem:[#allocation2 + $0xc0] sm:$0xff] %v1190
    %1195 = vst [vmem:[#allocation2 + $0xc8] sm:$0xff] %v1191
    %1196 = vst [vmem:[#allocation2 + $0xd0] sm:$0xff] %v1192
    %1197 = vst [vmem:[#allocation2 + $0xd8] sm:$0xff] %v1193
    %v1198 = vmul.f32 %v1116, %v826
    %v1199 = vmul.f32 %v1115, %v830
    %v1200 = vmul.f32 %v1114, %v834
    %v1201 = vmul.f32 %v1117, %v838
    %1202 = vst [vmem:[#allocation2 + $0xe0] sm:$0xff] %v1198
    %1203 = vst [vmem:[#allocation2 + $0xe8] sm:$0xff] %v1199
    %1204 = vst [vmem:[#allocation2 + $0xf0] sm:$0xff] %v1200
    %1205 = vst [vmem:[#allocation2 + $0xf8] sm:$0xff] %v1201
    %v1206 = vmul.f32 %v1136, %v850
    %v1207 = vmul.f32 %v1135, %v854
    %v1208 = vmul.f32 %v1134, %v858
    %v1209 = vmul.f32 %v1137, %v862
    %1210 = vst [vmem:[#allocation2 + $0x100] sm:$0xff] %v1206
    %1211 = vst [vmem:[#allocation2 + $0x108] sm:$0xff] %v1207
    %1212 = vst [vmem:[#allocation2 + $0x110] sm:$0xff] %v1208
    %1213 = vst [vmem:[#allocation2 + $0x118] sm:$0xff] %v1209
    %v1214 = vld [vmem:[%s7] sm:$0xff]
    %v1215 = vld [vmem:[#allocation2] sm:$0xff]
    %v1216 = vld [vmem:[#allocation2 + $0x8] sm:$0xff]
    %v1217 = vld [vmem:[#allocation2 + $0x10] sm:$0xff]
    %v1218 = vld [vmem:[#allocation2 + $0x18] sm:$0xff]
    %v1219 = vld [vmem:[#allocation2 + $0x20] sm:$0xff]
    %v1220 = vld [vmem:[#allocation2 + $0x28] sm:$0xff]
    %v1221 = vld [vmem:[#allocation2 + $0x30] sm:$0xff]
    %v1222 = vld [vmem:[#allocation2 + $0x38] sm:$0xff]
    %v1223 = vld [vmem:[#allocation2 + $0x40] sm:$0xff]
    %v1224 = vld [vmem:[#allocation2 + $0x48] sm:$0xff]
    %v1225 = vld [vmem:[#allocation2 + $0x50] sm:$0xff]
    %v1226 = vld [vmem:[#allocation2 + $0x58] sm:$0xff]
    %v1227 = vld [vmem:[#allocation2 + $0x60] sm:$0xff]
    %v1228 = vld [vmem:[#allocation2 + $0x68] sm:$0xff]
    %v1229 = vld [vmem:[#allocation2 + $0x70] sm:$0xff]
    %v1230 = vld [vmem:[#allocation2 + $0x78] sm:$0xff]
    %v1231 = vld [vmem:[#allocation2 + $0x80] sm:$0xff]
    %v1232 = vld [vmem:[#allocation2 + $0x88] sm:$0xff]
    %v1233 = vld [vmem:[#allocation2 + $0x90] sm:$0xff]
    %v1234 = vld [vmem:[#allocation2 + $0x98] sm:$0xff]
    %v1235 = vld [vmem:[#allocation2 + $0xa0] sm:$0xff]
    %v1236 = vld [vmem:[#allocation2 + $0xa8] sm:$0xff]
    %v1237 = vld [vmem:[#allocation2 + $0xb0] sm:$0xff]
    %v1238 = vld [vmem:[#allocation2 + $0xb8] sm:$0xff]
    %v1239 = vld [vmem:[#allocation2 + $0xc0] sm:$0xff]
    %v1240 = vld [vmem:[#allocation2 + $0xc8] sm:$0xff]
    %v1241 = vld [vmem:[#allocation2 + $0xd0] sm:$0xff]
    %v1242 = vld [vmem:[#allocation2 + $0xd8] sm:$0xff]
    %v1243 = vld [vmem:[#allocation2 + $0xe0] sm:$0xff]
    %v1244 = vld [vmem:[#allocation2 + $0xe8] sm:$0xff]
    %v1245 = vld [vmem:[#allocation2 + $0xf0] sm:$0xff]
    %v1246 = vld [vmem:[#allocation2 + $0xf8] sm:$0xff]
    %v1247 = vld [vmem:[#allocation2 + $0x100] sm:$0xff]
    %v1248 = vld [vmem:[#allocation2 + $0x108] sm:$0xff]
    %v1249 = vld [vmem:[#allocation2 + $0x110] sm:$0xff]
    %v1250 = vld [vmem:[#allocation2 + $0x118] sm:$0xff]
    %v1252 = vsel %vm908, %v1214, 0
    %1254 = vmatprep.subr.mxu0 %v1216
    %1255 = vmatpush1.msra.mxu0 %v1215
    %1256 = vmatprep.subr.mxu0 %v1220
    %1257 = vmatpush1.msra.mxu0 %v1219
    %1258 = vmatprep.subr.mxu0 %v1224
    %1259 = vmatpush1.msra.mxu0 %v1223
    %1260 = vmatprep.subr.mxu0 %v1228
    %1261 = vmatpush1.msra.mxu0 %v1227
    %1262 = vmatprep.subr.mxu0 %v1232
    %1263 = vmatpush1.msra.mxu0 %v1231
    %1264 = vmatprep.subr.mxu0 %v1236
    %1265 = vmatpush1.msra.mxu0 %v1235
    %1266 = vmatprep.subr.mxu0 %v1240
    %1267 = vmatpush1.msra.mxu0 %v1239
    %1268 = vmatprep.subr.mxu0 %v1244
    %1269 = vmatpush1.msra.mxu0 %v1243
    %1270 = vmatprep.subr.mxu0 %v1248
    %1271 = vmatpush1.msra.mxu0 %v1247
    %1272 = vmatprep.subr.mxu0 0.0
    %1273 = vmatpush1.msra.mxu0 0.0
    %1274 = vmatprep.subr.mxu0 0.0
    %1275 = vmatpush1.msra.mxu0 0.0
    %1276 = vmatprep.subr.mxu0 0.0
    %1277 = vmatpush1.msra.mxu0 0.0
    %1278 = vmatprep.subr.mxu0 0.0
    %1279 = vmatpush1.msra.mxu0 0.0
    %1280 = vmatprep.subr.mxu0 0.0
    %1281 = vmatpush1.msra.mxu0 0.0
    %1282 = vmatprep.subr.mxu0 0.0
    %1283 = vmatpush1.msra.mxu0 0.0
    %1284 = vmatprep.subr.mxu0 0.0
    %1285 = vmatpush1.msra.mxu0 0.0
    %1286 = vmatprep.subr.mxu0 0.0
    %1287 = vmatpush1.msra.mxu0 0.0
    %1288 = vmatprep.subr.mxu0 0.0
    %1289 = vmatpush1.msra.mxu0 0.0
    %1290 = vmatprep.subr.mxu0 0.0
    %1291 = vmatpush1.msra.mxu0 0.0
    %1292 = vmatprep.subr.mxu0 0.0
    %1293 = vmatpush1.msra.mxu0 0.0
    %1294 = vmatprep.subr.mxu0 0.0
    %1295 = vmatpush1.msra.mxu0 0.0
    %1296 = vmatprep.subr.mxu0 0.0
    %1297 = vmatpush1.msra.mxu0 0.0
    %1298 = vmatprep.subr.mxu0 0.0
    %1299 = vmatpush1.msra.mxu0 0.0
    %1300 = vmatprep.subr.mxu0 0.0
    %1301 = vmatpush1.msra.mxu0 0.0
    %1302 = vmatprep.subr.mxu0 0.0
    %1303 = vmatpush1.msra.mxu0 0.0
    %1304 = vmatprep.subr.mxu0 0.0
    %1305 = vmatpush1.msra.mxu0 0.0
    %1306 = vmatprep.subr.mxu0 0.0
    %1307 = vmatpush1.msra.mxu0 0.0
    %1308 = vmatprep.subr.mxu0 0.0
    %1309 = vmatpush1.msra.mxu0 0.0
    %1310 = vmatprep.subr.mxu0 0.0
    %1311 = vmatpush1.msra.mxu0 0.0
    %1312 = vmatprep.subr.mxu0 0.0
    %1313 = vmatpush1.msra.mxu0 0.0
    %1314 = vmatprep.subr.mxu0 0.0
    %1315 = vmatpush1.msra.mxu0 0.0
    %1316 = vmatprep.subr.mxu0 0.0
    %1317 = vmatpush1.msra.mxu0 0.0
    %1318 = vmatprep.mubr.f32.mxu0 0.0
    %1319 = vmatmul.mubr.f32.gmra.mrb[0].mxu0 %v1252
    %v1320 = vpop.f32.mrb[0].mxu0
    %v1321 = vadd.f32 0.0, %v1320
    %v1322 = vpop.f32.mrb[0].mxu0
    %v1323 = vadd.f32 0.0, %v1322
    %1324 = vdwg.mxu0
    %1325 = vmatprep.subr.mxu0 %v1218
    %1326 = vmatpush1.msra.mxu0 %v1217
    %1327 = vmatprep.subr.mxu0 %v1222
    %1328 = vmatpush1.msra.mxu0 %v1221
    %1329 = vmatprep.subr.mxu0 %v1226
    %1330 = vmatpush1.msra.mxu0 %v1225
    %1331 = vmatprep.subr.mxu0 %v1230
    %1332 = vmatpush1.msra.mxu0 %v1229
    %1333 = vmatprep.subr.mxu0 %v1234
    %1334 = vmatpush1.msra.mxu0 %v1233
    %1335 = vmatprep.subr.mxu0 %v1238
    %1336 = vmatpush1.msra.mxu0 %v1237
    %1337 = vmatprep.subr.mxu0 %v1242
    %1338 = vmatpush1.msra.mxu0 %v1241
    %1339 = vmatprep.subr.mxu0 %v1246
    %1340 = vmatpush1.msra.mxu0 %v1245
    %1341 = vmatprep.subr.mxu0 %v1250
    %1342 = vmatpush1.msra.mxu0 %v1249
    %1343 = vmatprep.subr.mxu0 0.0
    %1344 = vmatpush1.msra.mxu0 0.0
    %1345 = vmatprep.subr.mxu0 0.0
    %1346 = vmatpush1.msra.mxu0 0.0
    %1347 = vmatprep.subr.mxu0 0.0
    %1348 = vmatpush1.msra.mxu0 0.0
    %1349 = vmatprep.subr.mxu0 0.0
    %1350 = vmatpush1.msra.mxu0 0.0
    %1351 = vmatprep.subr.mxu0 0.0
    %1352 = vmatpush1.msra.mxu0 0.0
    %1353 = vmatprep.subr.mxu0 0.0
    %1354 = vmatpush1.msra.mxu0 0.0
    %1355 = vmatprep.subr.mxu0 0.0
    %1356 = vmatpush1.msra.mxu0 0.0
    %1357 = vmatprep.subr.mxu0 0.0
    %1358 = vmatpush1.msra.mxu0 0.0
    %1359 = vmatprep.subr.mxu0 0.0
    %1360 = vmatpush1.msra.mxu0 0.0
    %1361 = vmatprep.subr.mxu0 0.0
    %1362 = vmatpush1.msra.mxu0 0.0
    %1363 = vmatprep.subr.mxu0 0.0
    %1364 = vmatpush1.msra.mxu0 0.0
    %1365 = vmatprep.subr.mxu0 0.0
    %1366 = vmatpush1.msra.mxu0 0.0
    %1367 = vmatprep.subr.mxu0 0.0
    %1368 = vmatpush1.msra.mxu0 0.0
    %1369 = vmatprep.subr.mxu0 0.0
    %1370 = vmatpush1.msra.mxu0 0.0
    %1371 = vmatprep.subr.mxu0 0.0
    %1372 = vmatpush1.msra.mxu0 0.0
    %1373 = vmatprep.subr.mxu0 0.0
    %1374 = vmatpush1.msra.mxu0 0.0
    %1375 = vmatprep.subr.mxu0 0.0
    %1376 = vmatpush1.msra.mxu0 0.0
    %1377 = vmatprep.subr.mxu0 0.0
    %1378 = vmatpush1.msra.mxu0 0.0
    %1379 = vmatprep.subr.mxu0 0.0
    %1380 = vmatpush1.msra.mxu0 0.0
    %1381 = vmatprep.subr.mxu0 0.0
    %1382 = vmatpush1.msra.mxu0 0.0
    %1383 = vmatprep.subr.mxu0 0.0
    %1384 = vmatpush1.msra.mxu0 0.0
    %1385 = vmatprep.subr.mxu0 0.0
    %1386 = vmatpush1.msra.mxu0 0.0
    %1387 = vmatprep.subr.mxu0 0.0
    %1388 = vmatpush1.msra.mxu0 0.0
    %1389 = vmatprep.mubr.f32.mxu0 0.0
    %1390 = vmatmul.mubr.f32.gmra.mrb[0].mxu0 %v1252
    %v1391 = vpop.f32.mrb[0].mxu0
    %v1392 = vadd.f32 0.0, %v1391
    %v1393 = vpop.f32.mrb[0].mxu0
    %v1394 = vadd.f32 0.0, %v1393
    %1395 = vdwg.mxu0
    %v1396 = vadd.f32 %v1321, %v1323
    %v1397 = vadd.f32 %v1396, %v1392
    %v1398 = vadd.f32 %v1397, %v1394
    %1399 = vadd.xlane.f32.xlu0 %v1398
    %v1400 = vpop.xlane.xlu0 %1399
    %v1401 = vmul.f32 %v1321, %v1321
    %v1402 = vmul.f32 %v1323, %v1323
    %v1403 = vmul.f32 %v1392, %v1392
    %v1404 = vmul.f32 %v1394, %v1394
    %v1405 = vadd.f32 %v1401, %v1402
    %v1406 = vadd.f32 %v1405, %v1403
    %v1407 = vadd.f32 %v1406, %v1404
    %1408 = vadd.xlane.f32.xlu0 %v1407
    %v1409 = vpop.xlane.xlu0 %1408
    %v1410 = vmul.f32 %v1400, 0.001953125
    %v1411 = vmul.f32 %v1409, 0.001953125
    %v1412 = vmul.f32 %v1410, %v1410
    %v1413 = vsub.f32 %v1411, %v1412
    %v1414 = vsub.f32 %v1321, %v1410
    %v1415 = vsub.f32 %v1323, %v1410
    %v1416 = vsub.f32 %v1392, %v1410
    %v1417 = vsub.f32 %v1394, %v1410
    %v1418 = vadd.f32 %v1413, 1e-05
    %v1419 = vrsqrt.pop %v1418
    %v1420 = vmul.f32 %v1414, %v1419
    %v1421 = vmul.f32 %v1415, %v1419
    %v1422 = vmul.f32 %v1416, %v1419
    %v1423 = vmul.f32 %v1417, %v1419
    %v1424 = vmax.f32 %v1420, 0.0
    %v1425 = vmax.f32 %v1421, 0.0
    %v1426 = vmax.f32 %v1422, 0.0
    %v1427 = vmax.f32 %v1423, 0.0
    %v1428 = vld [vmem:[%s8] sm:$0xff]
    %1430 = vset.pattern.permute.xlu0 0
    %1431 = vperm.xlu0 %1430, %v1428
    %v1432 = vpop.permute.xlu0 %1431
    %v1434 = vmul.f32 %v1432, %v1424
    %v1435 = vmul.f32 %v1432, %v1425
    %v1436 = vmul.f32 %v1432, %v1426
    %v1437 = vmul.f32 %v1432, %v1427
    %v1438 = vrot.slane %v1434, 4
    %v1439 = vadd.f32 %v1434, %v1438
    %v1440 = vrot.slane %v1439, 2
    %v1441 = vadd.f32 %v1439, %v1440
    %v1442 = vrot.slane %v1441, 1
    %v1443 = vadd.f32 %v1441, %v1442
    %v1444 = vrot.slane %v1435, 4
    %v1445 = vadd.f32 %v1435, %v1444
    %v1446 = vrot.slane %v1445, 2
    %v1447 = vadd.f32 %v1445, %v1446
    %v1448 = vrot.slane %v1447, 1
    %v1449 = vadd.f32 %v1447, %v1448
    %v1450 = vrot.slane %v1436, 4
    %v1451 = vadd.f32 %v1436, %v1450
    %v1452 = vrot.slane %v1451, 2
    %v1453 = vadd.f32 %v1451, %v1452
    %v1454 = vrot.slane %v1453, 1
    %v1455 = vadd.f32 %v1453, %v1454
    %v1456 = vrot.slane %v1437, 4
    %v1457 = vadd.f32 %v1437, %v1456
    %v1458 = vrot.slane %v1457, 2
    %v1459 = vadd.f32 %v1457, %v1458
    %v1460 = vrot.slane %v1459, 1
    %v1461 = vadd.f32 %v1459, %v1460
    %v1462 = vadd.f32 %v1443, %v1449
    %v1463 = vadd.f32 %v1462, %v1455
    %v1464 = vadd.f32 %v1463, %v1461
    %1465 = vadd.xlane.f32.xlu0 %v1464
    %v1466 = vpop.xlane.xlu0 %1465
    %v1467 = vmul.f32 %v1443, %v1443
    %v1468 = vmul.f32 %v1449, %v1449
    %v1469 = vmul.f32 %v1455, %v1455
    %v1470 = vmul.f32 %v1461, %v1461
    %v1471 = vadd.f32 %v1467, %v1468
    %v1472 = vadd.f32 %v1471, %v1469
    %v1473 = vadd.f32 %v1472, %v1470
    %1474 = vadd.xlane.f32.xlu0 %v1473
    %v1475 = vpop.xlane.xlu0 %1474
    %v1476 = vmul.f32 %v1466, 0.001953125
    %v1477 = vmul.f32 %v1475, 0.001953125
    %v1478 = vmul.f32 %v1476, %v1476
    %v1479 = vsub.f32 %v1477, %v1478
    %v1480 = vsub.f32 %v1443, %v1476
    %v1481 = vsub.f32 %v1449, %v1476
    %v1482 = vsub.f32 %v1455, %v1476
    %v1483 = vsub.f32 %v1461, %v1476
    %v1484 = vadd.f32 %v1479, 1e-05
    %v1485 = vrsqrt.pop %v1484
    %v1486 = vmul.f32 %v1480, %v1485
    %v1487 = vmul.f32 %v1481, %v1485
    %v1488 = vmul.f32 %v1482, %v1485
    %v1489 = vmul.f32 %v1483, %v1485
    %v1490 = vmax.f32 %v1486, 0.0
    %v1491 = vmax.f32 %v1487, 0.0
    %v1492 = vmax.f32 %v1488, 0.0
    %v1493 = vmax.f32 %v1489, 0.0
    %1495 = vset.pattern.permute.xlu0 0
    %1496 = vperm.xlu0 %1495, %v384
    %v1497 = vpop.permute.xlu0 %1496
    %1500 = vset.pattern.permute.xlu0 0
    %1501 = vperm.xlu0 %1500, %v389
    %v1502 = vpop.permute.xlu0 %1501
    %1505 = vset.pattern.permute.xlu0 0
    %1506 = vperm.xlu0 %1505, %v394
    %v1507 = vpop.permute.xlu0 %1506
    %1510 = vset.pattern.permute.xlu0 0
    %1511 = vperm.xlu0 %1510, %v399
    %v1512 = vpop.permute.xlu0 %1511
    %1515 = vset.pattern.permute.xlu0 0
    %1516 = vperm.xlu0 %1515, %v404
    %v1517 = vpop.permute.xlu0 %1516
    %1520 = vset.pattern.permute.xlu0 0
    %1521 = vperm.xlu0 %1520, %v409
    %v1522 = vpop.permute.xlu0 %1521
    %1525 = vset.pattern.permute.xlu0 0
    %1526 = vperm.xlu0 %1525, %v414
    %v1527 = vpop.permute.xlu0 %1526
    %1530 = vset.pattern.permute.xlu0 0
    %1531 = vperm.xlu0 %1530, %v419
    %v1532 = vpop.permute.xlu0 %1531
    %v1534 = vadd.f32 %v1497, %v1490
    %v1535 = vadd.f32 %v1497, %v1491
    %v1536 = vadd.f32 %v1502, %v1490
    %v1537 = vadd.f32 %v1502, %v1491
    %v1538 = vadd.f32 %v1507, %v1490
    %v1539 = vadd.f32 %v1507, %v1491
    %v1540 = vadd.f32 %v1512, %v1490
    %v1541 = vadd.f32 %v1512, %v1491
    %v1542 = vadd.f32 %v1517, %v1490
    %v1543 = vadd.f32 %v1517, %v1491
    %v1544 = vadd.f32 %v1522, %v1490
    %v1545 = vadd.f32 %v1522, %v1491
    %v1546 = vadd.f32 %v1527, %v1490
    %v1547 = vadd.f32 %v1527, %v1491
    %v1548 = vadd.f32 %v1532, %v1490
    %v1549 = vadd.f32 %v1532, %v1491
    %v1550 = vmul.f32 %v1534, 0.5
    %v1551 = vmul.f32 %v1535, 0.5
    %v1552 = vmul.f32 %v1536, 0.5
    %v1553 = vmul.f32 %v1537, 0.5
    %v1554 = vmul.f32 %v1538, 0.5
    %v1555 = vmul.f32 %v1539, 0.5
    %v1556 = vmul.f32 %v1540, 0.5
    %v1557 = vmul.f32 %v1541, 0.5
    %v1558 = vmul.f32 %v1542, 0.5
    %v1559 = vmul.f32 %v1543, 0.5
    %v1560 = vmul.f32 %v1544, 0.5
    %v1561 = vmul.f32 %v1545, 0.5
    %v1562 = vmul.f32 %v1546, 0.5
    %v1563 = vmul.f32 %v1547, 0.5
    %v1564 = vmul.f32 %v1548, 0.5
    %v1565 = vmul.f32 %v1549, 0.5
    %v1566 = vtanh.pop %v1550
    %v1567 = vtanh.pop %v1551
    %v1568 = vtanh.pop %v1552
    %v1569 = vtanh.pop %v1553
    %v1570 = vtanh.pop %v1554
    %v1571 = vtanh.pop %v1555
    %v1572 = vtanh.pop %v1556
    %v1573 = vtanh.pop %v1557
    %v1574 = vtanh.pop %v1558
    %v1575 = vtanh.pop %v1559
    %v1576 = vtanh.pop %v1560
    %v1577 = vtanh.pop %v1561
    %v1578 = vtanh.pop %v1562
    %v1579 = vtanh.pop %v1563
    %v1580 = vtanh.pop %v1564
    %v1581 = vtanh.pop %v1565
    %v1582 = vmul.f32 %v1566, 0.5
    %v1583 = vmul.f32 %v1567, 0.5
    %v1584 = vmul.f32 %v1568, 0.5
    %v1585 = vmul.f32 %v1569, 0.5
    %v1586 = vmul.f32 %v1570, 0.5
    %v1587 = vmul.f32 %v1571, 0.5
    %v1588 = vmul.f32 %v1572, 0.5
    %v1589 = vmul.f32 %v1573, 0.5
    %v1590 = vmul.f32 %v1574, 0.5
    %v1591 = vmul.f32 %v1575, 0.5
    %v1592 = vmul.f32 %v1576, 0.5
    %v1593 = vmul.f32 %v1577, 0.5
    %v1594 = vmul.f32 %v1578, 0.5
    %v1595 = vmul.f32 %v1579, 0.5
    %v1596 = vmul.f32 %v1580, 0.5
    %v1597 = vmul.f32 %v1581, 0.5
    %v1598 = vadd.f32 %v1582, 1.5
    %v1599 = vadd.f32 %v1583, 1.5
    %v1600 = vadd.f32 %v1584, 1.5
    %v1601 = vadd.f32 %v1585, 1.5
    %v1602 = vadd.f32 %v1586, 1.5
    %v1603 = vadd.f32 %v1587, 1.5
    %v1604 = vadd.f32 %v1588, 1.5
    %v1605 = vadd.f32 %v1589, 1.5
    %v1606 = vadd.f32 %v1590, 1.5
    %v1607 = vadd.f32 %v1591, 1.5
    %v1608 = vadd.f32 %v1592, 1.5
    %v1609 = vadd.f32 %v1593, 1.5
    %v1610 = vadd.f32 %v1594, 1.5
    %v1611 = vadd.f32 %v1595, 1.5
    %v1612 = vadd.f32 %v1596, 1.5
    %v1613 = vadd.f32 %v1597, 1.5
    %v1614 = vmul.f32 %v47, %v1598
    %v1615 = vmul.f32 %v48, %v1599
    %v1616 = vmul.f32 %v49, %v1600
    %v1617 = vmul.f32 %v50, %v1601
    %v1618 = vmul.f32 %v51, %v1602
    %v1619 = vmul.f32 %v52, %v1603
    %v1620 = vmul.f32 %v53, %v1604
    %v1621 = vmul.f32 %v54, %v1605
    %v1622 = vmul.f32 %v55, %v1606
    %v1623 = vmul.f32 %v56, %v1607
    %v1624 = vmul.f32 %v57, %v1608
    %v1625 = vmul.f32 %v58, %v1609
    %v1626 = vmul.f32 %v59, %v1610
    %v1627 = vmul.f32 %v60, %v1611
    %v1628 = vmul.f32 %v61, %v1612
    %v1629 = vmul.f32 %v62, %v1613
    %1630 = vst [vmem:[#allocation6] sm:$0xff] %v1614
    %1631 = vst [vmem:[#allocation6 + $0x8] sm:$0xff] %v1615
    %1632 = vst [vmem:[#allocation6 + $0x10] sm:$0xff] %v1616
    %1633 = vst [vmem:[#allocation6 + $0x18] sm:$0xff] %v1617
    %1634 = vst [vmem:[#allocation6 + $0x20] sm:$0xff] %v1618
    %1635 = vst [vmem:[#allocation6 + $0x28] sm:$0xff] %v1619
    %1636 = vst [vmem:[#allocation6 + $0x30] sm:$0xff] %v1620
    %1637 = vst [vmem:[#allocation6 + $0x38] sm:$0xff] %v1621
    %1638 = vst [vmem:[#allocation6 + $0x40] sm:$0xff] %v1622
    %1639 = vst [vmem:[#allocation6 + $0x48] sm:$0xff] %v1623
    %1640 = vst [vmem:[#allocation6 + $0x50] sm:$0xff] %v1624
    %1641 = vst [vmem:[#allocation6 + $0x58] sm:$0xff] %v1625
    %1642 = vst [vmem:[#allocation6 + $0x60] sm:$0xff] %v1626
    %1643 = vst [vmem:[#allocation6 + $0x68] sm:$0xff] %v1627
    %1644 = vst [vmem:[#allocation6 + $0x70] sm:$0xff] %v1628
    %1645 = vst [vmem:[#allocation6 + $0x78] sm:$0xff] %v1629
    %1646 = vset.pattern.permute.xlu0 1
    %1647 = vperm.xlu0 %1646, %v384
    %v1648 = vpop.permute.xlu0 %1647
    %1650 = vset.pattern.permute.xlu0 1
    %1651 = vperm.xlu0 %1650, %v389
    %v1652 = vpop.permute.xlu0 %1651
    %1654 = vset.pattern.permute.xlu0 1
    %1655 = vperm.xlu0 %1654, %v394
    %v1656 = vpop.permute.xlu0 %1655
    %1658 = vset.pattern.permute.xlu0 1
    %1659 = vperm.xlu0 %1658, %v399
    %v1660 = vpop.permute.xlu0 %1659
    %1662 = vset.pattern.permute.xlu0 1
    %1663 = vperm.xlu0 %1662, %v404
    %v1664 = vpop.permute.xlu0 %1663
    %1666 = vset.pattern.permute.xlu0 1
    %1667 = vperm.xlu0 %1666, %v409
    %v1668 = vpop.permute.xlu0 %1667
    %1670 = vset.pattern.permute.xlu0 1
    %1671 = vperm.xlu0 %1670, %v414
    %v1672 = vpop.permute.xlu0 %1671
    %1674 = vset.pattern.permute.xlu0 1
    %1675 = vperm.xlu0 %1674, %v419
    %v1676 = vpop.permute.xlu0 %1675
    %v1678 = vadd.f32 %v1648, %v1492
    %v1679 = vadd.f32 %v1648, %v1493
    %v1680 = vadd.f32 %v1652, %v1492
    %v1681 = vadd.f32 %v1652, %v1493
    %v1682 = vadd.f32 %v1656, %v1492
    %v1683 = vadd.f32 %v1656, %v1493
    %v1684 = vadd.f32 %v1660, %v1492
    %v1685 = vadd.f32 %v1660, %v1493
    %v1686 = vadd.f32 %v1664, %v1492
    %v1687 = vadd.f32 %v1664, %v1493
    %v1688 = vadd.f32 %v1668, %v1492
    %v1689 = vadd.f32 %v1668, %v1493
    %v1690 = vadd.f32 %v1672, %v1492
    %v1691 = vadd.f32 %v1672, %v1493
    %v1692 = vadd.f32 %v1676, %v1492
    %v1693 = vadd.f32 %v1676, %v1493
    %v1694 = vmul.f32 %v1678, 0.5
    %v1695 = vmul.f32 %v1679, 0.5
    %v1696 = vmul.f32 %v1680, 0.5
    %v1697 = vmul.f32 %v1681, 0.5
    %v1698 = vmul.f32 %v1682, 0.5
    %v1699 = vmul.f32 %v1683, 0.5
    %v1700 = vmul.f32 %v1684, 0.5
    %v1701 = vmul.f32 %v1685, 0.5
    %v1702 = vmul.f32 %v1686, 0.5
    %v1703 = vmul.f32 %v1687, 0.5
    %v1704 = vmul.f32 %v1688, 0.5
    %v1705 = vmul.f32 %v1689, 0.5
    %v1706 = vmul.f32 %v1690, 0.5
    %v1707 = vmul.f32 %v1691, 0.5
    %v1708 = vmul.f32 %v1692, 0.5
    %v1709 = vmul.f32 %v1693, 0.5
    %v1710 = vtanh.pop %v1694
    %v1711 = vtanh.pop %v1695
    %v1712 = vtanh.pop %v1696
    %v1713 = vtanh.pop %v1697
    %v1714 = vtanh.pop %v1698
    %v1715 = vtanh.pop %v1699
    %v1716 = vtanh.pop %v1700
    %v1717 = vtanh.pop %v1701
    %v1718 = vtanh.pop %v1702
    %v1719 = vtanh.pop %v1703
    %v1720 = vtanh.pop %v1704
    %v1721 = vtanh.pop %v1705
    %v1722 = vtanh.pop %v1706
    %v1723 = vtanh.pop %v1707
    %v1724 = vtanh.pop %v1708
    %v1725 = vtanh.pop %v1709
    %v1726 = vmul.f32 %v1710, 0.5
    %v1727 = vmul.f32 %v1711, 0.5
    %v1728 = vmul.f32 %v1712, 0.5
    %v1729 = vmul.f32 %v1713, 0.5
    %v1730 = vmul.f32 %v1714, 0.5
    %v1731 = vmul.f32 %v1715, 0.5
    %v1732 = vmul.f32 %v1716, 0.5
    %v1733 = vmul.f32 %v1717, 0.5
    %v1734 = vmul.f32 %v1718, 0.5
    %v1735 = vmul.f32 %v1719, 0.5
    %v1736 = vmul.f32 %v1720, 0.5
    %v1737 = vmul.f32 %v1721, 0.5
    %v1738 = vmul.f32 %v1722, 0.5
    %v1739 = vmul.f32 %v1723, 0.5
    %v1740 = vmul.f32 %v1724, 0.5
    %v1741 = vmul.f32 %v1725, 0.5
    %v1742 = vadd.f32 %v1726, 1.5
    %v1743 = vadd.f32 %v1727, 1.5
    %v1744 = vadd.f32 %v1728, 1.5
    %v1745 = vadd.f32 %v1729, 1.5
    %v1746 = vadd.f32 %v1730, 1.5
    %v1747 = vadd.f32 %v1731, 1.5
    %v1748 = vadd.f32 %v1732, 1.5
    %v1749 = vadd.f32 %v1733, 1.5
    %v1750 = vadd.f32 %v1734, 1.5
    %v1751 = vadd.f32 %v1735, 1.5
    %v1752 = vadd.f32 %v1736, 1.5
    %v1753 = vadd.f32 %v1737, 1.5
    %v1754 = vadd.f32 %v1738, 1.5
    %v1755 = vadd.f32 %v1739, 1.5
    %v1756 = vadd.f32 %v1740, 1.5
    %v1757 = vadd.f32 %v1741, 1.5
    %v1758 = vmul.f32 %v63, %v1742
    %v1759 = vmul.f32 %v64, %v1743
    %v1760 = vmul.f32 %v65, %v1744
    %v1761 = vmul.f32 %v66, %v1745
    %v1762 = vmul.f32 %v67, %v1746
    %v1763 = vmul.f32 %v68, %v1747
    %v1764 = vmul.f32 %v69, %v1748
    %v1765 = vmul.f32 %v70, %v1749
    %v1766 = vmul.f32 %v71, %v1750
    %v1767 = vmul.f32 %v72, %v1751
    %v1768 = vmul.f32 %v73, %v1752
    %v1769 = vmul.f32 %v74, %v1753
    %v1770 = vmul.f32 %v75, %v1754
    %v1771 = vmul.f32 %v76, %v1755
    %v1772 = vmul.f32 %v77, %v1756
    %v1773 = vmul.f32 %v78, %v1757
    %1774 = vst [vmem:[#allocation6 + $0x80] sm:$0xff] %v1758
    %1775 = vst [vmem:[#allocation6 + $0x88] sm:$0xff] %v1759
    %1776 = vst [vmem:[#allocation6 + $0x90] sm:$0xff] %v1760
    %1777 = vst [vmem:[#allocation6 + $0x98] sm:$0xff] %v1761
    %1778 = vst [vmem:[#allocation6 + $0xa0] sm:$0xff] %v1762
    %1779 = vst [vmem:[#allocation6 + $0xa8] sm:$0xff] %v1763
    %1780 = vst [vmem:[#allocation6 + $0xb0] sm:$0xff] %v1764
    %1781 = vst [vmem:[#allocation6 + $0xb8] sm:$0xff] %v1765
    %1782 = vst [vmem:[#allocation6 + $0xc0] sm:$0xff] %v1766
    %1783 = vst [vmem:[#allocation6 + $0xc8] sm:$0xff] %v1767
    %1784 = vst [vmem:[#allocation6 + $0xd0] sm:$0xff] %v1768
    %1785 = vst [vmem:[#allocation6 + $0xd8] sm:$0xff] %v1769
    %1786 = vst [vmem:[#allocation6 + $0xe0] sm:$0xff] %v1770
    %1787 = vst [vmem:[#allocation6 + $0xe8] sm:$0xff] %v1771
    %1788 = vst [vmem:[#allocation6 + $0xf0] sm:$0xff] %v1772
    %1789 = vst [vmem:[#allocation6 + $0xf8] sm:$0xff] %v1773
    // Predicated region
    $region42: #{tpu_custom_call.1} parent=1 // pred_check
      _
    $region43: #{tpu_custom_call.1} parent=1 // pred_check_branch
      %1791 = sbr.rel (0) target = $region45
    $region44: #{tpu_custom_call.1} parent=1 // pred_region
      %s1793 = ssub.s32 4096, 4096
      %1794 = vsyncadd [#allocation5], %s1793
      %s1795 = sshll.u32 [#allocation6], 4
      %s1796 = int_to_ptr.vmem [resolvable:$true] %s1795
      %1801 = dma.vmem_to_hbm [thread:$0]  %s1796, 4096, %s9, [#allocation5], 256, 256, 16
    $region45: #{tpu_custom_call.1} parent=1 // pred_fallthru
      _
    // Predicated region
    $region46: #{tpu_custom_call.1} parent=1 // pred_check
      _
    $region47: #{tpu_custom_call.1} parent=1 // pred_check_branch
      %1803 = sbr.rel (0) target = $region49
    $region48: #{tpu_custom_call.1} parent=1 // pred_region
      %1804 = dma.done [#allocation5], 4096
    $region49: #{tpu_custom_call.1} parent=1 // pred_fallthru
      _
    %1805 = vsyncpa [#allocation4], 1
    %1806 = vsyncpa [#allocation5], 1

</llo_original>
